<compile_context>
chip_gen: v5e
topology: v5e:2x2
jax: 0.10.0
libtpu: 0.0.40
codegen_flags: <defaults>
</compile_context>

<pallas_src>
import jax
import jax.numpy as jnp
from jax import lax
from jax.experimental import pallas as pl
from jax.experimental.pallas import tpu as pltpu

LANE = 128  # TPU lane width


def _round_up(a, b):
    return (a + b - 1) // b * b


# ----------------------------- fused Pallas kernel -----------------------------
def _make_fused_kernel(D, H, W, HW, Dout, Tb, RB, Kpad, P3D, E, PADL, cdt):
    """3x3x3 conv (+bias, +hybrid ones channel) and the stride-7 spectral
    projection fused in one kernel; the folded activation never leaves VMEM."""

    def kernel(x_ref, w1x_ref, w2_ref, bp_ref, o_ref, xpad, p_scr):
        # --- stage the (D, H*W) plane stack into a lane-padded scratch --------
        # The zero bands supply the H-border zeros of the (0,1,1) padding; the
        # W-border wrap is masked below.  PADL >= W+1 so every tap read stays
        # inside the bands (fixes the old PADL==128 OOB hazard for W >= 128).
        xpad[:, pl.ds(0, PADL)] = jnp.zeros((D, PADL), cdt)
        xpad[:, pl.ds(PADL + HW, PADL)] = jnp.zeros((D, PADL), cdt)
        xpad[:, pl.ds(PADL, HW)] = x_ref[0]

        w_idx = lax.broadcasted_iota(jnp.int32, (Dout, HW), 1) % W

        # --- im2col patch matrix: 27 block stores of (Dout, HW) ---------------
        # row j = k*Dout + d', k = kd*9 + kh*3 + kw (matches conv_w.reshape(Cout,27))
        for kd in range(3):
            for kh in range(3):
                for kw in range(3):
                    k = (kd * 3 + kh) * 3 + kw
                    off = (kh - 1) * W + (kw - 1)
                    slab = xpad[pl.ds(kd, Dout), pl.ds(PADL + off, HW)]
                    if kw == 2:      # reads column w+1 -> invalid at w == W-1
                        slab = jnp.where(w_idx < W - 1, slab, jnp.zeros_like(slab))
                    elif kw == 0:    # reads column w-1 -> invalid at w == 0
                        slab = jnp.where(w_idx >= 1, slab, jnp.zeros_like(slab))
                    p_scr[pl.ds(k * Dout, Dout), :] = slab
        # constant ones row carries the conv bias / hybrid channel; pad rows zeroed
        p_scr[pl.ds(P3D, 1), :] = jnp.ones((1, HW), cdt)
        if Kpad > P3D + 1:
            p_scr[pl.ds(P3D + 1, Kpad - P3D - 1), :] = jnp.zeros(
                (Kpad - P3D - 1, HW), cdt)

        # --- conv + hybrid + bias as ONE GEMM, straight into the folded -------
        # spectral row layout (row l = c*Dout + d); f32 accumulators, never HBM.
        res = jnp.dot(w1x_ref[...], p_scr[...],
                      preferred_element_type=jnp.float32)            # (RB, HW)

        # --- stride-7 spectral projection --------------------------------------
        # Token t consumes 7 *contiguous* folded rows, so the regroup is a plain
        # sublane slice; proj bias is a hoisted broadcast add; the (E, HW) stores
        # are lane-dense and unmasked.
        bpb = jnp.broadcast_to(bp_ref[...], (E, HW))
        for tt in range(Tb):
            g = res[7 * tt:7 * tt + 7, :]                            # (7, HW) f32
            o_ref[0, :, tt * HW:(tt + 1) * HW] = (
                jnp.dot(w2_ref[...], g, preferred_element_type=jnp.float32)
                + bpb).astype(o_ref.dtype)

    return kernel


# ------------------------------ forward pass ----------------------------------
def linear_projection_forward(x, params, *, patch_size, embed_dim, input_size):
    B, C, D, H, W = x.shape
    assert C == 1, "Conv3d(in_channels=1) requires a single input channel"
    assert H == input_size[0] and W == input_size[1], (
        f"Input image size ({H}*{W}) doesn't match model "
        f"({input_size[0]}*{input_size[1]}).")
    # TODO(synk): the in-kernel tap construction assumes the module default
    # patch_size=3 (padding (0,1,1)); generalize for other kernel sizes.
    assert patch_size == 3
    assert D >= patch_size
    HW = H * W
    assert HW % LANE == 0, "flattened H*W must be a multiple of 128 (lane width)"

    w1, b1, wp, bp = params["conv_w"], params["conv_b"], params["proj_w"], params["proj_b"]
    Cout = w1.shape[0]
    E = embed_dim
    P3 = patch_size ** 3
    Dout = D - (patch_size - 1)                    # depth padding is 0
    L = (Cout + 1) * Dout                          # folded spectral length
    assert L % 7 == 0, "folded spectral length must be a multiple of 7"
    T = L // 7

    # Second parallel grid axis (v7x has 2 TensorCores): split the T token
    # blocks so even B == 1 yields >= 2 blocks per batch.
    NTB = 2 if T % 2 == 0 else 1
    Tb = T // NTB
    RB = _round_up(7 * Tb, 8)                      # padded folded rows per block
    P3D = P3 * Dout                                # tap rows of the patch matrix
    Kpad = _round_up(P3D + 1, 8)                   # + ones row, sublane padded
    PADL = max(LANE, _round_up(W + 1, LANE))       # halo bands sized for any W

    cdt = jnp.bfloat16                             # memory bound: bf16 activations/weights
    f32 = jnp.float32

    xf = x.reshape(B, D, HW).astype(cdt)           # the only HBM copy of the input

    # ---- expanded conv weight (host-side) ------------------------------------
    # W1x[l, k*Dout + d'] = conv_w[c(l), k] * [d' == d(l)]   with l = c*Dout + d.
    # Column P3D multiplies the ones row of the patch -> conv bias for conv rows,
    # 1 for hybrid rows, so one GEMM emits the full folded activation.
    w1flat = w1.reshape(Cout, P3).astype(f32)
    l_idx = jnp.arange(L)
    c_of_l = l_idx // Dout
    d_of_l = l_idx % Dout
    is_conv = c_of_l < Cout
    c_safe = jnp.minimum(c_of_l, Cout - 1)
    tap_w = jnp.where(is_conv[:, None], w1flat[c_safe, :], 0.0)           # (L, 27)
    d_sel = (d_of_l[:, None] == jnp.arange(Dout)[None, :]).astype(f32)    # (L, Dout)
    taps_full = (tap_w[:, :, None] * d_sel[:, None, :]).reshape(L, P3D)
    bias_col = jnp.where(is_conv, b1.astype(f32)[c_safe], 1.0)            # (L,)
    w1x = jnp.concatenate(
        [taps_full, bias_col[:, None], jnp.zeros((L, Kpad - P3D - 1), f32)], axis=1)
    w1x = w1x.reshape(NTB, 7 * Tb, Kpad)
    w1x = jnp.pad(w1x, ((0, 0), (0, RB - 7 * Tb), (0, 0))).reshape(NTB * RB, Kpad)
    w1x = w1x.astype(cdt)

    # Projection weights/bias stay f32: the second GEMM consumes f32 accumulators.
    w2 = wp.reshape(E, 7).astype(f32)
    bp2 = bp.reshape(E, 1).astype(f32)

    kernel = _make_fused_kernel(D, H, W, HW, Dout, Tb, RB, Kpad, P3D, E, PADL, cdt)

    # Per-step VMEM footprint -> explicit limit (double-buffered blocks + scratch),
    # capped at v7x's 64 MiB per-core VMEM.
    blk_bytes = (D * HW * 2 + RB * Kpad * 2 + E * 7 * 4 + E * 4 + E * Tb * HW * 4)
    scratch_bytes = D * (HW + 2 * PADL) * 2 + Kpad * HW * 2
    vmem_limit = int(min(max(4 * (2 * blk_bytes + scratch_bytes), 8 << 20), 64 << 20))

    # TODO(synk): for production-scale H*W the patch scratch no longer fits one
    # block; tile the flattened spatial axis with halo columns in that case.
    out = pl.pallas_call(
        kernel,
        out_shape=jax.ShapeDtypeStruct((B, E, T * HW), jnp.float32),
        grid=(B, NTB),
        in_specs=[
            pl.BlockSpec((1, D, HW), lambda b, s: (b, 0, 0)),   # x (re-DMA only on new b)
            pl.BlockSpec((RB, Kpad), lambda b, s: (s, 0)),      # expanded conv weights
            pl.BlockSpec((E, 7), lambda b, s: (0, 0)),          # proj weights (resident)
            pl.BlockSpec((E, 1), lambda b, s: (0, 0)),          # proj bias   (resident)
        ],
        out_specs=pl.BlockSpec((1, E, Tb * HW), lambda b, s: (b, 0, s)),
        scratch_shapes=[
            pltpu.VMEM((D, HW + 2 * PADL), cdt),                # lane-padded input planes
            pltpu.VMEM((Kpad, HW), cdt),                        # in-VMEM im2col patch matrix
        ],
        compiler_params=pltpu.CompilerParams(
            dimension_semantics=("parallel", "parallel"),
            vmem_limit_bytes=vmem_limit),
    )(xf, w1x, w2, bp2)

    # TODO(synk): emit bf16 here if downstream accepts it (halves the writeback);
    # kept f32 to preserve the module's output dtype.
    return out.reshape(B, E, T, H, W)


# --------------------------- pure-JAX reference --------------------------------
def reference_forward(x, params):
    w1, b1, wp, bp = params["conv_w"], params["conv_b"], params["proj_w"], params["proj_b"]
    dn = lax.conv_dimension_numbers(x.shape, w1.shape, ("NCDHW", "OIDHW", "NCDHW"))
    y = lax.conv_general_dilated(x, w1, (1, 1, 1), [(0, 0), (1, 1), (1, 1)],
                                 dimension_numbers=dn)
    y = y + b1[None, :, None, None, None]
    B, Co, Dp, H, W = y.shape
    # hybrid_position_embedding: softmax over a size-1 channel dim == 1; the
    # (B,1,Dp) tensor broadcasts over (H, W) so the concat is well-formed.
    y = jnp.concatenate([y, jnp.ones((B, 1, Dp, H, W), y.dtype)], axis=1)
    # proj expects in_channels == 1; fold channels into the depth axis.
    y = y.reshape(B, 1, (Co + 1) * Dp, H, W)
    dn2 = lax.conv_dimension_numbers(y.shape, wp.shape, ("NCDHW", "OIDHW", "NCDHW"))
    z = lax.conv_general_dilated(y, wp, (7, 1, 1), [(0, 0), (0, 0), (0, 0)],
                                 dimension_numbers=dn2)
    return z + bp[None, :, None, None, None]


# ------------------------------ params / main ----------------------------------
def init_params(key, in_chans, patch_size, embed_dim):
    Cout = int((in_chans - 7) / 2 + 1)
    k1, k2, k3, k4 = jax.random.split(key, 4)
    return {
        "conv_w": 0.1 * jax.random.normal(
            k1, (Cout, 1, patch_size, patch_size, patch_size), jnp.float32),
        "conv_b": 0.01 * jax.random.normal(k2, (Cout,), jnp.float32),
        "proj_w": 0.1 * jax.random.normal(k3, (embed_dim, 1, 7, 1, 1), jnp.float32),
        "proj_b": 0.01 * jax.random.normal(k4, (embed_dim,), jnp.float32),
    }


if __name__ == "__main__":
    # Small shapes consistent with the module: in_chans=31 -> Cout=13, so the
    # 14 concatenated "spectral" channels fold into stride-7 proj tokens;
    # H*W = 128 keeps the flattened spatial axis on a full lane tile.
    B, D, H, W = 2, 5, 8, 16
    in_chans, patch_size, embed_dim = 31, 3, 8

    key = jax.random.PRNGKey(0)
    kp, kx = jax.random.split(key)
    params = init_params(kp, in_chans, patch_size, embed_dim)
    x = jax.random.normal(kx, (B, 1, D, H, W), jnp.float32)

    fwd = jax.jit(lambda xx: linear_projection_forward(
        xx, params, patch_size=patch_size, embed_dim=embed_dim, input_size=(H, W)))
    y = fwd(x)
    jax.block_until_ready(y)

    y_ref = reference_forward(x, params)
    Cout = int((in_chans - 7) / 2 + 1)
    T = ((Cout + 1) * (D - 2)) // 7
    assert y.shape == y_ref.shape == (B, embed_dim, T, H, W), (y.shape, y_ref.shape)
    err = float(jnp.max(jnp.abs(y - y_ref)))
    assert jnp.allclose(y, y_ref, rtol=2e-2, atol=2e-2), f"max abs err {err}"
    print("KERNEL_OK")
</pallas_src>

<mosaic_0001>
module attributes {stable_mosaic.version = 11 : i64} {
  func.func @kernel(%arg0: i32, %arg1: i32, %arg2: memref<1x5x128xbf16, #tpu.memory_space<vmem>>, %arg3: memref<24x88xbf16, #tpu.memory_space<vmem>>, %arg4: memref<8x7xf32, #tpu.memory_space<vmem>>, %arg5: memref<8x1xf32, #tpu.memory_space<vmem>>, %arg6: memref<1x8x384xf32, #tpu.memory_space<vmem>>, %arg7: memref<5x384xbf16, #tpu.memory_space<vmem>>, %arg8: memref<88x128xbf16, #tpu.memory_space<vmem>>) attributes {dimension_semantics = [#tpu.dimension_semantics<parallel>, #tpu.dimension_semantics<parallel>], iteration_bounds = array<i64: 2, 2>, scalar_prefetch = 0 : i64, scratch_operands = 2 : i64, tpu.core_type = #tpu.core_type<tc>, window_params = [{transform_indices = @transform_0, window_bounds = array<i64: 1, 5, 128>}, {transform_indices = @transform_1, window_bounds = array<i64: 24, 88>}, {pipeline_mode = #tpu.pipeline_mode<synchronous>, transform_indices = @transform_2, window_bounds = array<i64: 8, 7>}, {pipeline_mode = #tpu.pipeline_mode<synchronous>, transform_indices = @transform_3, window_bounds = array<i64: 8, 1>}, {transform_indices = @transform_4, window_bounds = array<i64: 1, 8, 384>}]} {
    %cst = arith.constant 0.000000e+00 : bf16
    %0 = vector.broadcast %cst : bf16 to vector<5x128xbf16>
    %c0 = arith.constant 0 : index
    %c0_0 = arith.constant 0 : index
    %1 = vector.load %arg7[%c0, %c0_0] : memref<5x384xbf16, #tpu.memory_space<vmem>>, vector<5x128xbf16>
    tpu.vector_store %arg7[%c0, %c0_0], %0 {strides = array<i32>} : memref<5x384xbf16, #tpu.memory_space<vmem>>, vector<5x128xbf16>,
    %cst_1 = arith.constant 0.000000e+00 : bf16
    %2 = vector.broadcast %cst_1 : bf16 to vector<5x128xbf16>
    %c0_2 = arith.constant 0 : index
    %c256 = arith.constant 256 : index
    %3 = vector.load %arg7[%c0_2, %c256] : memref<5x384xbf16, #tpu.memory_space<vmem>>, vector<5x128xbf16>
    tpu.vector_store %arg7[%c0_2, %c256], %2 {strides = array<i32>} : memref<5x384xbf16, #tpu.memory_space<vmem>>, vector<5x128xbf16>,
    %c0_3 = arith.constant 0 : index
    %c0_4 = arith.constant 0 : index
    %c0_5 = arith.constant 0 : index
    %4 = vector.load %arg2[%c0_3, %c0_4, %c0_5] : memref<1x5x128xbf16, #tpu.memory_space<vmem>>, vector<1x5x128xbf16>
    %5 = vector.shape_cast %4 : vector<1x5x128xbf16> to vector<5x128xbf16>
    %c0_6 = arith.constant 0 : index
    %c128 = arith.constant 128 : index
    %6 = vector.load %arg7[%c0_6, %c128] : memref<5x384xbf16, #tpu.memory_space<vmem>>, vector<5x128xbf16>
    tpu.vector_store %arg7[%c0_6, %c128], %5 {strides = array<i32>} : memref<5x384xbf16, #tpu.memory_space<vmem>>, vector<5x128xbf16>,
    %7 = tpu.iota {dimensions = array<i32: 1>} : vector<3x128xi32>
    %c16_i32 = arith.constant 16 : i32
    %c0_i32 = arith.constant 0 : i32
    %8 = arith.cmpi eq, %c16_i32, %c0_i32 : i32
    %c1_i32 = arith.constant 1 : i32
    %9 = arith.select %8, %c1_i32, %c16_i32 : i32
    %10 = vector.broadcast %9 : i32 to vector<3x128xi32>
    %11 = arith.remsi %7, %10 : vector<3x128xi32>
    %c0_i32_7 = arith.constant 0 : i32
    %12 = vector.broadcast %c0_i32_7 : i32 to vector<3x128xi32>
    %13 = arith.cmpi ne, %11, %12 : vector<3x128xi32>
    %c0_i32_8 = arith.constant 0 : i32
    %14 = vector.broadcast %c0_i32_8 : i32 to vector<3x128xi32>
    %15 = arith.cmpi slt, %11, %14 : vector<3x128xi32>
    %c0_i32_9 = arith.constant 0 : i32
    %16 = arith.cmpi slt, %9, %c0_i32_9 : i32
    %17 = vector.broadcast %16 : i1 to vector<3x128xi1>
    %18 = vector.broadcast %17 : vector<3x128xi1> to vector<3x128xi1>
    %19 = arith.xori %15, %18 : vector<3x128xi1>
    %20 = arith.andi %19, %13 : vector<3x128xi1>
    %21 = vector.broadcast %9 : i32 to vector<3x128xi32>
    %22 = arith.addi %11, %21 : vector<3x128xi32>
    %23 = arith.select %20, %22, %11 : vector<3x128xi1>, vector<3x128xi32>
    %c0_10 = arith.constant 0 : index
    %c111 = arith.constant 111 : index
    %24 = vector.load %arg7[%c0_10, %c111] : memref<5x384xbf16, #tpu.memory_space<vmem>>, vector<3x128xbf16>
    %c1_i32_11 = arith.constant 1 : i32
    %25 = vector.broadcast %c1_i32_11 : i32 to vector<3x128xi32>
    %26 = arith.cmpi sge, %23, %25 : vector<3x128xi32>
    %cst_12 = arith.constant 0.000000e+00 : bf16
    %27 = vector.broadcast %cst_12 : bf16 to vector<3x128xbf16>
    %28 = arith.select %26, %24, %27 : vector<3x128xi1>, vector<3x128xbf16>
    %c0_13 = arith.constant 0 : index
    %c0_14 = arith.constant 0 : index
    %29 = vector.load %arg8[%c0_13, %c0_14] : memref<88x128xbf16, #tpu.memory_space<vmem>>, vector<3x128xbf16>
    tpu.vector_store %arg8[%c0_13, %c0_14], %28 {strides = array<i32>} : memref<88x128xbf16, #tpu.memory_space<vmem>>, vector<3x128xbf16>,
    %c0_15 = arith.constant 0 : index
    %c112 = arith.constant 112 : index
    %30 = vector.load %arg7[%c0_15, %c112] : memref<5x384xbf16, #tpu.memory_space<vmem>>, vector<3x128xbf16>
    %c3 = arith.constant 3 : index
    %c0_16 = arith.constant 0 : index
    %31 = vector.load %arg8[%c3, %c0_16] : memref<88x128xbf16, #tpu.memory_space<vmem>>, vector<3x128xbf16>
    tpu.vector_store %arg8[%c3, %c0_16], %30 {strides = array<i32>} : memref<88x128xbf16, #tpu.memory_space<vmem>>, vector<3x128xbf16>,
    %c0_17 = arith.constant 0 : index
    %c113 = arith.constant 113 : index
    %32 = vector.load %arg7[%c0_17, %c113] : memref<5x384xbf16, #tpu.memory_space<vmem>>, vector<3x128xbf16>
    %c15_i32 = arith.constant 15 : i32
    %33 = vector.broadcast %c15_i32 : i32 to vector<3x128xi32>
    %34 = arith.cmpi slt, %23, %33 : vector<3x128xi32>
    %cst_18 = arith.constant 0.000000e+00 : bf16
    %35 = vector.broadcast %cst_18 : bf16 to vector<3x128xbf16>
    %36 = arith.select %34, %32, %35 : vector<3x128xi1>, vector<3x128xbf16>
    %c6 = arith.constant 6 : index
    %c0_19 = arith.constant 0 : index
    %37 = vector.load %arg8[%c6, %c0_19] : memref<88x128xbf16, #tpu.memory_space<vmem>>, vector<3x128xbf16>
    tpu.vector_store %arg8[%c6, %c0_19], %36 {strides = array<i32>} : memref<88x128xbf16, #tpu.memory_space<vmem>>, vector<3x128xbf16>,
    %c0_20 = arith.constant 0 : index
    %c127 = arith.constant 127 : index
    %38 = vector.load %arg7[%c0_20, %c127] : memref<5x384xbf16, #tpu.memory_space<vmem>>, vector<3x128xbf16>
    %c1_i32_21 = arith.constant 1 : i32
    %39 = vector.broadcast %c1_i32_21 : i32 to vector<3x128xi32>
    %40 = arith.cmpi sge, %23, %39 : vector<3x128xi32>
    %cst_22 = arith.constant 0.000000e+00 : bf16
    %41 = vector.broadcast %cst_22 : bf16 to vector<3x128xbf16>
    %42 = arith.select %40, %38, %41 : vector<3x128xi1>, vector<3x128xbf16>
    %c9 = arith.constant 9 : index
    %c0_23 = arith.constant 0 : index
    %43 = vector.load %arg8[%c9, %c0_23] : memref<88x128xbf16, #tpu.memory_space<vmem>>, vector<3x128xbf16>
    tpu.vector_store %arg8[%c9, %c0_23], %42 {strides = array<i32>} : memref<88x128xbf16, #tpu.memory_space<vmem>>, vector<3x128xbf16>,
    %c0_24 = arith.constant 0 : index
    %c128_25 = arith.constant 128 : index
    %44 = vector.load %arg7[%c0_24, %c128_25] : memref<5x384xbf16, #tpu.memory_space<vmem>>, vector<3x128xbf16>
    %c12 = arith.constant 12 : index
    %c0_26 = arith.constant 0 : index
    %45 = vector.load %arg8[%c12, %c0_26] : memref<88x128xbf16, #tpu.memory_space<vmem>>, vector<3x128xbf16>
    tpu.vector_store %arg8[%c12, %c0_26], %44 {strides = array<i32>} : memref<88x128xbf16, #tpu.memory_space<vmem>>, vector<3x128xbf16>,
    %c0_27 = arith.constant 0 : index
    %c129 = arith.constant 129 : index
    %46 = vector.load %arg7[%c0_27, %c129] : memref<5x384xbf16, #tpu.memory_space<vmem>>, vector<3x128xbf16>
    %c15_i32_28 = arith.constant 15 : i32
    %47 = vector.broadcast %c15_i32_28 : i32 to vector<3x128xi32>
    %48 = arith.cmpi slt, %23, %47 : vector<3x128xi32>
    %cst_29 = arith.constant 0.000000e+00 : bf16
    %49 = vector.broadcast %cst_29 : bf16 to vector<3x128xbf16>
    %50 = arith.select %48, %46, %49 : vector<3x128xi1>, vector<3x128xbf16>
    %c15 = arith.constant 15 : index
    %c0_30 = arith.constant 0 : index
    %51 = vector.load %arg8[%c15, %c0_30] : memref<88x128xbf16, #tpu.memory_space<vmem>>, vector<3x128xbf16>
    tpu.vector_store %arg8[%c15, %c0_30], %50 {strides = array<i32>} : memref<88x128xbf16, #tpu.memory_space<vmem>>, vector<3x128xbf16>,
    %c0_31 = arith.constant 0 : index
    %c143 = arith.constant 143 : index
    %52 = vector.load %arg7[%c0_31, %c143] : memref<5x384xbf16, #tpu.memory_space<vmem>>, vector<3x128xbf16>
    %c1_i32_32 = arith.constant 1 : i32
    %53 = vector.broadcast %c1_i32_32 : i32 to vector<3x128xi32>
    %54 = arith.cmpi sge, %23, %53 : vector<3x128xi32>
    %cst_33 = arith.constant 0.000000e+00 : bf16
    %55 = vector.broadcast %cst_33 : bf16 to vector<3x128xbf16>
    %56 = arith.select %54, %52, %55 : vector<3x128xi1>, vector<3x128xbf16>
    %c18 = arith.constant 18 : index
    %c0_34 = arith.constant 0 : index
    %57 = vector.load %arg8[%c18, %c0_34] : memref<88x128xbf16, #tpu.memory_space<vmem>>, vector<3x128xbf16>
    tpu.vector_store %arg8[%c18, %c0_34], %56 {strides = array<i32>} : memref<88x128xbf16, #tpu.memory_space<vmem>>, vector<3x128xbf16>,
    %c0_35 = arith.constant 0 : index
    %c144 = arith.constant 144 : index
    %58 = vector.load %arg7[%c0_35, %c144] : memref<5x384xbf16, #tpu.memory_space<vmem>>, vector<3x128xbf16>
    %c21 = arith.constant 21 : index
    %c0_36 = arith.constant 0 : index
    %59 = vector.load %arg8[%c21, %c0_36] : memref<88x128xbf16, #tpu.memory_space<vmem>>, vector<3x128xbf16>
    tpu.vector_store %arg8[%c21, %c0_36], %58 {strides = array<i32>} : memref<88x128xbf16, #tpu.memory_space<vmem>>, vector<3x128xbf16>,
    %c0_37 = arith.constant 0 : index
    %c145 = arith.constant 145 : index
    %60 = vector.load %arg7[%c0_37, %c145] : memref<5x384xbf16, #tpu.memory_space<vmem>>, vector<3x128xbf16>
    %c15_i32_38 = arith.constant 15 : i32
    %61 = vector.broadcast %c15_i32_38 : i32 to vector<3x128xi32>
    %62 = arith.cmpi slt, %23, %61 : vector<3x128xi32>
    %cst_39 = arith.constant 0.000000e+00 : bf16
    %63 = vector.broadcast %cst_39 : bf16 to vector<3x128xbf16>
    %64 = arith.select %62, %60, %63 : vector<3x128xi1>, vector<3x128xbf16>
    %c24 = arith.constant 24 : index
    %c0_40 = arith.constant 0 : index
    %65 = vector.load %arg8[%c24, %c0_40] : memref<88x128xbf16, #tpu.memory_space<vmem>>, vector<3x128xbf16>
    tpu.vector_store %arg8[%c24, %c0_40], %64 {strides = array<i32>} : memref<88x128xbf16, #tpu.memory_space<vmem>>, vector<3x128xbf16>,
    %c1 = arith.constant 1 : index
    %c111_41 = arith.constant 111 : index
    %66 = vector.load %arg7[%c1, %c111_41] : memref<5x384xbf16, #tpu.memory_space<vmem>>, vector<3x128xbf16>
    %c1_i32_42 = arith.constant 1 : i32
    %67 = vector.broadcast %c1_i32_42 : i32 to vector<3x128xi32>
    %68 = arith.cmpi sge, %23, %67 : vector<3x128xi32>
    %cst_43 = arith.constant 0.000000e+00 : bf16
    %69 = vector.broadcast %cst_43 : bf16 to vector<3x128xbf16>
    %70 = arith.select %68, %66, %69 : vector<3x128xi1>, vector<3x128xbf16>
    %c27 = arith.constant 27 : index
    %c0_44 = arith.constant 0 : index
    %71 = vector.load %arg8[%c27, %c0_44] : memref<88x128xbf16, #tpu.memory_space<vmem>>, vector<3x128xbf16>
    tpu.vector_store %arg8[%c27, %c0_44], %70 {strides = array<i32>} : memref<88x128xbf16, #tpu.memory_space<vmem>>, vector<3x128xbf16>,
    %c1_45 = arith.constant 1 : index
    %c112_46 = arith.constant 112 : index
    %72 = vector.load %arg7[%c1_45, %c112_46] : memref<5x384xbf16, #tpu.memory_space<vmem>>, vector<3x128xbf16>
    %c30 = arith.constant 30 : index
    %c0_47 = arith.constant 0 : index
    %73 = vector.load %arg8[%c30, %c0_47] : memref<88x128xbf16, #tpu.memory_space<vmem>>, vector<3x128xbf16>
    tpu.vector_store %arg8[%c30, %c0_47], %72 {strides = array<i32>} : memref<88x128xbf16, #tpu.memory_space<vmem>>, vector<3x128xbf16>,
    %c1_48 = arith.constant 1 : index
    %c113_49 = arith.constant 113 : index
    %74 = vector.load %arg7[%c1_48, %c113_49] : memref<5x384xbf16, #tpu.memory_space<vmem>>, vector<3x128xbf16>
    %c15_i32_50 = arith.constant 15 : i32
    %75 = vector.broadcast %c15_i32_50 : i32 to vector<3x128xi32>
    %76 = arith.cmpi slt, %23, %75 : vector<3x128xi32>
    %cst_51 = arith.constant 0.000000e+00 : bf16
    %77 = vector.broadcast %cst_51 : bf16 to vector<3x128xbf16>
    %78 = arith.select %76, %74, %77 : vector<3x128xi1>, vector<3x128xbf16>
    %c33 = arith.constant 33 : index
    %c0_52 = arith.constant 0 : index
    %79 = vector.load %arg8[%c33, %c0_52] : memref<88x128xbf16, #tpu.memory_space<vmem>>, vector<3x128xbf16>
    tpu.vector_store %arg8[%c33, %c0_52], %78 {strides = array<i32>} : memref<88x128xbf16, #tpu.memory_space<vmem>>, vector<3x128xbf16>,
    %c1_53 = arith.constant 1 : index
    %c127_54 = arith.constant 127 : index
    %80 = vector.load %arg7[%c1_53, %c127_54] : memref<5x384xbf16, #tpu.memory_space<vmem>>, vector<3x128xbf16>
    %c1_i32_55 = arith.constant 1 : i32
    %81 = vector.broadcast %c1_i32_55 : i32 to vector<3x128xi32>
    %82 = arith.cmpi sge, %23, %81 : vector<3x128xi32>
    %cst_56 = arith.constant 0.000000e+00 : bf16
    %83 = vector.broadcast %cst_56 : bf16 to vector<3x128xbf16>
    %84 = arith.select %82, %80, %83 : vector<3x128xi1>, vector<3x128xbf16>
    %c36 = arith.constant 36 : index
    %c0_57 = arith.constant 0 : index
    %85 = vector.load %arg8[%c36, %c0_57] : memref<88x128xbf16, #tpu.memory_space<vmem>>, vector<3x128xbf16>
    tpu.vector_store %arg8[%c36, %c0_57], %84 {strides = array<i32>} : memref<88x128xbf16, #tpu.memory_space<vmem>>, vector<3x128xbf16>,
    %c1_58 = arith.constant 1 : index
    %c128_59 = arith.constant 128 : index
    %86 = vector.load %arg7[%c1_58, %c128_59] : memref<5x384xbf16, #tpu.memory_space<vmem>>, vector<3x128xbf16>
    %c39 = arith.constant 39 : index
    %c0_60 = arith.constant 0 : index
    %87 = vector.load %arg8[%c39, %c0_60] : memref<88x128xbf16, #tpu.memory_space<vmem>>, vector<3x128xbf16>
    tpu.vector_store %arg8[%c39, %c0_60], %86 {strides = array<i32>} : memref<88x128xbf16, #tpu.memory_space<vmem>>, vector<3x128xbf16>,
    %c1_61 = arith.constant 1 : index
    %c129_62 = arith.constant 129 : index
    %88 = vector.load %arg7[%c1_61, %c129_62] : memref<5x384xbf16, #tpu.memory_space<vmem>>, vector<3x128xbf16>
    %c15_i32_63 = arith.constant 15 : i32
    %89 = vector.broadcast %c15_i32_63 : i32 to vector<3x128xi32>
    %90 = arith.cmpi slt, %23, %89 : vector<3x128xi32>
    %cst_64 = arith.constant 0.000000e+00 : bf16
    %91 = vector.broadcast %cst_64 : bf16 to vector<3x128xbf16>
    %92 = arith.select %90, %88, %91 : vector<3x128xi1>, vector<3x128xbf16>
    %c42 = arith.constant 42 : index
    %c0_65 = arith.constant 0 : index
    %93 = vector.load %arg8[%c42, %c0_65] : memref<88x128xbf16, #tpu.memory_space<vmem>>, vector<3x128xbf16>
    tpu.vector_store %arg8[%c42, %c0_65], %92 {strides = array<i32>} : memref<88x128xbf16, #tpu.memory_space<vmem>>, vector<3x128xbf16>,
    %c1_66 = arith.constant 1 : index
    %c143_67 = arith.constant 143 : index
    %94 = vector.load %arg7[%c1_66, %c143_67] : memref<5x384xbf16, #tpu.memory_space<vmem>>, vector<3x128xbf16>
    %c1_i32_68 = arith.constant 1 : i32
    %95 = vector.broadcast %c1_i32_68 : i32 to vector<3x128xi32>
    %96 = arith.cmpi sge, %23, %95 : vector<3x128xi32>
    %cst_69 = arith.constant 0.000000e+00 : bf16
    %97 = vector.broadcast %cst_69 : bf16 to vector<3x128xbf16>
    %98 = arith.select %96, %94, %97 : vector<3x128xi1>, vector<3x128xbf16>
    %c45 = arith.constant 45 : index
    %c0_70 = arith.constant 0 : index
    %99 = vector.load %arg8[%c45, %c0_70] : memref<88x128xbf16, #tpu.memory_space<vmem>>, vector<3x128xbf16>
    tpu.vector_store %arg8[%c45, %c0_70], %98 {strides = array<i32>} : memref<88x128xbf16, #tpu.memory_space<vmem>>, vector<3x128xbf16>,
    %c1_71 = arith.constant 1 : index
    %c144_72 = arith.constant 144 : index
    %100 = vector.load %arg7[%c1_71, %c144_72] : memref<5x384xbf16, #tpu.memory_space<vmem>>, vector<3x128xbf16>
    %c48 = arith.constant 48 : index
    %c0_73 = arith.constant 0 : index
    %101 = vector.load %arg8[%c48, %c0_73] : memref<88x128xbf16, #tpu.memory_space<vmem>>, vector<3x128xbf16>
    tpu.vector_store %arg8[%c48, %c0_73], %100 {strides = array<i32>} : memref<88x128xbf16, #tpu.memory_space<vmem>>, vector<3x128xbf16>,
    %c1_74 = arith.constant 1 : index
    %c145_75 = arith.constant 145 : index
    %102 = vector.load %arg7[%c1_74, %c145_75] : memref<5x384xbf16, #tpu.memory_space<vmem>>, vector<3x128xbf16>
    %c15_i32_76 = arith.constant 15 : i32
    %103 = vector.broadcast %c15_i32_76 : i32 to vector<3x128xi32>
    %104 = arith.cmpi slt, %23, %103 : vector<3x128xi32>
    %cst_77 = arith.constant 0.000000e+00 : bf16
    %105 = vector.broadcast %cst_77 : bf16 to vector<3x128xbf16>
    %106 = arith.select %104, %102, %105 : vector<3x128xi1>, vector<3x128xbf16>
    %c51 = arith.constant 51 : index
    %c0_78 = arith.constant 0 : index
    %107 = vector.load %arg8[%c51, %c0_78] : memref<88x128xbf16, #tpu.memory_space<vmem>>, vector<3x128xbf16>
    tpu.vector_store %arg8[%c51, %c0_78], %106 {strides = array<i32>} : memref<88x128xbf16, #tpu.memory_space<vmem>>, vector<3x128xbf16>,
    %c2 = arith.constant 2 : index
    %c111_79 = arith.constant 111 : index
    %108 = vector.load %arg7[%c2, %c111_79] : memref<5x384xbf16, #tpu.memory_space<vmem>>, vector<3x128xbf16>
    %c1_i32_80 = arith.constant 1 : i32
    %109 = vector.broadcast %c1_i32_80 : i32 to vector<3x128xi32>
    %110 = arith.cmpi sge, %23, %109 : vector<3x128xi32>
    %cst_81 = arith.constant 0.000000e+00 : bf16
    %111 = vector.broadcast %cst_81 : bf16 to vector<3x128xbf16>
    %112 = arith.select %110, %108, %111 : vector<3x128xi1>, vector<3x128xbf16>
    %c54 = arith.constant 54 : index
    %c0_82 = arith.constant 0 : index
    %113 = vector.load %arg8[%c54, %c0_82] : memref<88x128xbf16, #tpu.memory_space<vmem>>, vector<3x128xbf16>
    tpu.vector_store %arg8[%c54, %c0_82], %112 {strides = array<i32>} : memref<88x128xbf16, #tpu.memory_space<vmem>>, vector<3x128xbf16>,
    %c2_83 = arith.constant 2 : index
    %c112_84 = arith.constant 112 : index
    %114 = vector.load %arg7[%c2_83, %c112_84] : memref<5x384xbf16, #tpu.memory_space<vmem>>, vector<3x128xbf16>
    %c57 = arith.constant 57 : index
    %c0_85 = arith.constant 0 : index
    %115 = vector.load %arg8[%c57, %c0_85] : memref<88x128xbf16, #tpu.memory_space<vmem>>, vector<3x128xbf16>
    tpu.vector_store %arg8[%c57, %c0_85], %114 {strides = array<i32>} : memref<88x128xbf16, #tpu.memory_space<vmem>>, vector<3x128xbf16>,
    %c2_86 = arith.constant 2 : index
    %c113_87 = arith.constant 113 : index
    %116 = vector.load %arg7[%c2_86, %c113_87] : memref<5x384xbf16, #tpu.memory_space<vmem>>, vector<3x128xbf16>
    %c15_i32_88 = arith.constant 15 : i32
    %117 = vector.broadcast %c15_i32_88 : i32 to vector<3x128xi32>
    %118 = arith.cmpi slt, %23, %117 : vector<3x128xi32>
    %cst_89 = arith.constant 0.000000e+00 : bf16
    %119 = vector.broadcast %cst_89 : bf16 to vector<3x128xbf16>
    %120 = arith.select %118, %116, %119 : vector<3x128xi1>, vector<3x128xbf16>
    %c60 = arith.constant 60 : index
    %c0_90 = arith.constant 0 : index
    %121 = vector.load %arg8[%c60, %c0_90] : memref<88x128xbf16, #tpu.memory_space<vmem>>, vector<3x128xbf16>
    tpu.vector_store %arg8[%c60, %c0_90], %120 {strides = array<i32>} : memref<88x128xbf16, #tpu.memory_space<vmem>>, vector<3x128xbf16>,
    %c2_91 = arith.constant 2 : index
    %c127_92 = arith.constant 127 : index
    %122 = vector.load %arg7[%c2_91, %c127_92] : memref<5x384xbf16, #tpu.memory_space<vmem>>, vector<3x128xbf16>
    %c1_i32_93 = arith.constant 1 : i32
    %123 = vector.broadcast %c1_i32_93 : i32 to vector<3x128xi32>
    %124 = arith.cmpi sge, %23, %123 : vector<3x128xi32>
    %cst_94 = arith.constant 0.000000e+00 : bf16
    %125 = vector.broadcast %cst_94 : bf16 to vector<3x128xbf16>
    %126 = arith.select %124, %122, %125 : vector<3x128xi1>, vector<3x128xbf16>
    %c63 = arith.constant 63 : index
    %c0_95 = arith.constant 0 : index
    %127 = vector.load %arg8[%c63, %c0_95] : memref<88x128xbf16, #tpu.memory_space<vmem>>, vector<3x128xbf16>
    tpu.vector_store %arg8[%c63, %c0_95], %126 {strides = array<i32>} : memref<88x128xbf16, #tpu.memory_space<vmem>>, vector<3x128xbf16>,
    %c2_96 = arith.constant 2 : index
    %c128_97 = arith.constant 128 : index
    %128 = vector.load %arg7[%c2_96, %c128_97] : memref<5x384xbf16, #tpu.memory_space<vmem>>, vector<3x128xbf16>
    %c66 = arith.constant 66 : index
    %c0_98 = arith.constant 0 : index
    %129 = vector.load %arg8[%c66, %c0_98] : memref<88x128xbf16, #tpu.memory_space<vmem>>, vector<3x128xbf16>
    tpu.vector_store %arg8[%c66, %c0_98], %128 {strides = array<i32>} : memref<88x128xbf16, #tpu.memory_space<vmem>>, vector<3x128xbf16>,
    %c2_99 = arith.constant 2 : index
    %c129_100 = arith.constant 129 : index
    %130 = vector.load %arg7[%c2_99, %c129_100] : memref<5x384xbf16, #tpu.memory_space<vmem>>, vector<3x128xbf16>
    %c15_i32_101 = arith.constant 15 : i32
    %131 = vector.broadcast %c15_i32_101 : i32 to vector<3x128xi32>
    %132 = arith.cmpi slt, %23, %131 : vector<3x128xi32>
    %cst_102 = arith.constant 0.000000e+00 : bf16
    %133 = vector.broadcast %cst_102 : bf16 to vector<3x128xbf16>
    %134 = arith.select %132, %130, %133 : vector<3x128xi1>, vector<3x128xbf16>
    %c69 = arith.constant 69 : index
    %c0_103 = arith.constant 0 : index
    %135 = vector.load %arg8[%c69, %c0_103] : memref<88x128xbf16, #tpu.memory_space<vmem>>, vector<3x128xbf16>
    tpu.vector_store %arg8[%c69, %c0_103], %134 {strides = array<i32>} : memref<88x128xbf16, #tpu.memory_space<vmem>>, vector<3x128xbf16>,
    %c2_104 = arith.constant 2 : index
    %c143_105 = arith.constant 143 : index
    %136 = vector.load %arg7[%c2_104, %c143_105] : memref<5x384xbf16, #tpu.memory_space<vmem>>, vector<3x128xbf16>
    %c1_i32_106 = arith.constant 1 : i32
    %137 = vector.broadcast %c1_i32_106 : i32 to vector<3x128xi32>
    %138 = arith.cmpi sge, %23, %137 : vector<3x128xi32>
    %cst_107 = arith.constant 0.000000e+00 : bf16
    %139 = vector.broadcast %cst_107 : bf16 to vector<3x128xbf16>
    %140 = arith.select %138, %136, %139 : vector<3x128xi1>, vector<3x128xbf16>
    %c72 = arith.constant 72 : index
    %c0_108 = arith.constant 0 : index
    %141 = vector.load %arg8[%c72, %c0_108] : memref<88x128xbf16, #tpu.memory_space<vmem>>, vector<3x128xbf16>
    tpu.vector_store %arg8[%c72, %c0_108], %140 {strides = array<i32>} : memref<88x128xbf16, #tpu.memory_space<vmem>>, vector<3x128xbf16>,
    %c2_109 = arith.constant 2 : index
    %c144_110 = arith.constant 144 : index
    %142 = vector.load %arg7[%c2_109, %c144_110] : memref<5x384xbf16, #tpu.memory_space<vmem>>, vector<3x128xbf16>
    %c75 = arith.constant 75 : index
    %c0_111 = arith.constant 0 : index
    %143 = vector.load %arg8[%c75, %c0_111] : memref<88x128xbf16, #tpu.memory_space<vmem>>, vector<3x128xbf16>
    tpu.vector_store %arg8[%c75, %c0_111], %142 {strides = array<i32>} : memref<88x128xbf16, #tpu.memory_space<vmem>>, vector<3x128xbf16>,
    %c2_112 = arith.constant 2 : index
    %c145_113 = arith.constant 145 : index
    %144 = vector.load %arg7[%c2_112, %c145_113] : memref<5x384xbf16, #tpu.memory_space<vmem>>, vector<3x128xbf16>
    %c15_i32_114 = arith.constant 15 : i32
    %145 = vector.broadcast %c15_i32_114 : i32 to vector<3x128xi32>
    %146 = arith.cmpi slt, %23, %145 : vector<3x128xi32>
    %cst_115 = arith.constant 0.000000e+00 : bf16
    %147 = vector.broadcast %cst_115 : bf16 to vector<3x128xbf16>
    %148 = arith.select %146, %144, %147 : vector<3x128xi1>, vector<3x128xbf16>
    %c78 = arith.constant 78 : index
    %c0_116 = arith.constant 0 : index
    %149 = vector.load %arg8[%c78, %c0_116] : memref<88x128xbf16, #tpu.memory_space<vmem>>, vector<3x128xbf16>
    tpu.vector_store %arg8[%c78, %c0_116], %148 {strides = array<i32>} : memref<88x128xbf16, #tpu.memory_space<vmem>>, vector<3x128xbf16>,
    %cst_117 = arith.constant 1.000000e+00 : bf16
    %150 = vector.broadcast %cst_117 : bf16 to vector<1x128xbf16>
    %c81 = arith.constant 81 : index
    %c0_118 = arith.constant 0 : index
    %151 = vector.load %arg8[%c81, %c0_118] : memref<88x128xbf16, #tpu.memory_space<vmem>>, vector<1x128xbf16>
    tpu.vector_store %arg8[%c81, %c0_118], %150 {strides = array<i32>} : memref<88x128xbf16, #tpu.memory_space<vmem>>, vector<1x128xbf16>,
    %cst_119 = arith.constant 0.000000e+00 : bf16
    %152 = vector.broadcast %cst_119 : bf16 to vector<6x128xbf16>
    %c82 = arith.constant 82 : index
    %c0_120 = arith.constant 0 : index
    %153 = vector.load %arg8[%c82, %c0_120] : memref<88x128xbf16, #tpu.memory_space<vmem>>, vector<6x128xbf16>
    tpu.vector_store %arg8[%c82, %c0_120], %152 {strides = array<i32>} : memref<88x128xbf16, #tpu.memory_space<vmem>>, vector<6x128xbf16>,
    %c0_121 = arith.constant 0 : index
    %c0_122 = arith.constant 0 : index
    %154 = vector.load %arg3[%c0_121, %c0_122] : memref<24x88xbf16, #tpu.memory_space<vmem>>, vector<24x88xbf16>
    %c0_123 = arith.constant 0 : index
    %c0_124 = arith.constant 0 : index
    %155 = vector.load %arg8[%c0_123, %c0_124] : memref<88x128xbf16, #tpu.memory_space<vmem>>, vector<88x128xbf16>
    %cst_125 = arith.constant dense<0.000000e+00> : vector<24x128xf32>
    %156 = tpu.matmul %154, %155, %cst_125 {dimension_numbers = #tpu.dot_dimension_numbers<[1], [0], [0], [1], [0, 0, 1, 1], [], []>} : vector<24x88xbf16>, vector<88x128xbf16>, vector<24x128xf32> -> vector<24x128xf32>
    %c0_126 = arith.constant 0 : index
    %c0_127 = arith.constant 0 : index
    %157 = vector.load %arg5[%c0_126, %c0_127] : memref<8x1xf32, #tpu.memory_space<vmem>>, vector<8x1xf32>
    %158 = vector.shape_cast %157 : vector<8x1xf32> to vector<8x1xf32>
    %159 = vector.broadcast %158 : vector<8x1xf32> to vector<8x128xf32>
    %160 = vector.extract_strided_slice %156 {offsets = [0, 0], sizes = [7, 128], strides = [1, 1]} : vector<24x128xf32> to vector<7x128xf32>
    %c0_128 = arith.constant 0 : index
    %c0_129 = arith.constant 0 : index
    %161 = vector.load %arg4[%c0_128, %c0_129] : memref<8x7xf32, #tpu.memory_space<vmem>>, vector<8x7xf32>
    %cst_130 = arith.constant dense<0.000000e+00> : vector<8x128xf32>
    %162 = tpu.matmul %161, %160, %cst_130 {dimension_numbers = #tpu.dot_dimension_numbers<[1], [0], [0], [1], [0, 0, 1, 1], [], []>} : vector<8x7xf32>, vector<7x128xf32>, vector<8x128xf32> -> vector<8x128xf32>
    %163 = arith.addf %162, %159 : vector<8x128xf32>
    %c0_131 = arith.constant 0 : index
    %c0_132 = arith.constant 0 : index
    %c0_133 = arith.constant 0 : index
    %164 = vector.load %arg6[%c0_131, %c0_132, %c0_133] : memref<1x8x384xf32, #tpu.memory_space<vmem>>, vector<1x8x128xf32>
    %165 = vector.shape_cast %164 : vector<1x8x128xf32> to vector<8x128xf32>
    %166 = vector.shape_cast %163 : vector<8x128xf32> to vector<1x8x128xf32>
    tpu.vector_store %arg6[%c0_131, %c0_132, %c0_133], %166 {strides = array<i32>} : memref<1x8x384xf32, #tpu.memory_space<vmem>>, vector<1x8x128xf32>,
    %167 = vector.extract_strided_slice %156 {offsets = [7, 0], sizes = [7, 128], strides = [1, 1]} : vector<24x128xf32> to vector<7x128xf32>
    %c0_134 = arith.constant 0 : index
    %c0_135 = arith.constant 0 : index
    %168 = vector.load %arg4[%c0_134, %c0_135] : memref<8x7xf32, #tpu.memory_space<vmem>>, vector<8x7xf32>
    %cst_136 = arith.constant dense<0.000000e+00> : vector<8x128xf32>
    %169 = tpu.matmul %168, %167, %cst_136 {dimension_numbers = #tpu.dot_dimension_numbers<[1], [0], [0], [1], [0, 0, 1, 1], [], []>} : vector<8x7xf32>, vector<7x128xf32>, vector<8x128xf32> -> vector<8x128xf32>
    %170 = arith.addf %169, %159 : vector<8x128xf32>
    %c0_137 = arith.constant 0 : index
    %c0_138 = arith.constant 0 : index
    %c128_139 = arith.constant 128 : index
    %171 = vector.load %arg6[%c0_137, %c0_138, %c128_139] : memref<1x8x384xf32, #tpu.memory_space<vmem>>, vector<1x8x128xf32>
    %172 = vector.shape_cast %171 : vector<1x8x128xf32> to vector<8x128xf32>
    %173 = vector.shape_cast %170 : vector<8x128xf32> to vector<1x8x128xf32>
    tpu.vector_store %arg6[%c0_137, %c0_138, %c128_139], %173 {strides = array<i32>} : memref<1x8x384xf32, #tpu.memory_space<vmem>>, vector<1x8x128xf32>,
    %174 = vector.extract_strided_slice %156 {offsets = [14, 0], sizes = [7, 128], strides = [1, 1]} : vector<24x128xf32> to vector<7x128xf32>
    %c0_140 = arith.constant 0 : index
    %c0_141 = arith.constant 0 : index
    %175 = vector.load %arg4[%c0_140, %c0_141] : memref<8x7xf32, #tpu.memory_space<vmem>>, vector<8x7xf32>
    %cst_142 = arith.constant dense<0.000000e+00> : vector<8x128xf32>
    %176 = tpu.matmul %175, %174, %cst_142 {dimension_numbers = #tpu.dot_dimension_numbers<[1], [0], [0], [1], [0, 0, 1, 1], [], []>} : vector<8x7xf32>, vector<7x128xf32>, vector<8x128xf32> -> vector<8x128xf32>
    %177 = arith.addf %176, %159 : vector<8x128xf32>
    %c0_143 = arith.constant 0 : index
    %c0_144 = arith.constant 0 : index
    %c256_145 = arith.constant 256 : index
    %178 = vector.load %arg6[%c0_143, %c0_144, %c256_145] : memref<1x8x384xf32, #tpu.memory_space<vmem>>, vector<1x8x128xf32>
    %179 = vector.shape_cast %178 : vector<1x8x128xf32> to vector<8x128xf32>
    %180 = vector.shape_cast %177 : vector<8x128xf32> to vector<1x8x128xf32>
    tpu.vector_store %arg6[%c0_143, %c0_144, %c256_145], %180 {strides = array<i32>} : memref<1x8x384xf32, #tpu.memory_space<vmem>>, vector<1x8x128xf32>,
    return
  }
  func.func @transform_0(%arg0: i32, %arg1: i32) -> (i32, i32, i32) {
    %c0_i32 = arith.constant 0 : i32
    %c0_i32_0 = arith.constant 0 : i32
    %c0_i32_1 = arith.constant 0 : i32
    return %arg0, %c0_i32, %c0_i32_0 : i32, i32, i32
  }
  func.func @transform_1(%arg0: i32, %arg1: i32) -> (i32, i32) {
    %c0_i32 = arith.constant 0 : i32
    %c0_i32_0 = arith.constant 0 : i32
    return %arg1, %c0_i32 : i32, i32
  }
  func.func @transform_2(%arg0: i32, %arg1: i32) -> (i32, i32) {
    %c0_i32 = arith.constant 0 : i32
    %c0_i32_0 = arith.constant 0 : i32
    %c0_i32_1 = arith.constant 0 : i32
    return %c0_i32, %c0_i32_0 : i32, i32
  }
  func.func @transform_3(%arg0: i32, %arg1: i32) -> (i32, i32) {
    %c0_i32 = arith.constant 0 : i32
    %c0_i32_0 = arith.constant 0 : i32
    %c0_i32_1 = arith.constant 0 : i32
    return %c0_i32, %c0_i32_0 : i32, i32
  }
  func.func @transform_4(%arg0: i32, %arg1: i32) -> (i32, i32, i32) {
    %c0_i32 = arith.constant 0 : i32
    %c0_i32_0 = arith.constant 0 : i32
    return %arg0, %c0_i32, %arg1 : i32, i32, i32
  }
}

</mosaic_0001>

<llo_original>
// kernel: _lambda_.1
$region0: #{_lambda_.1}
  #allocation0 [shape = 'u32[]', space=smem, size = 0x4, offset = 0x4, fixed_abs, tag = 'smem constant byte address 0x4 - core index']
  #allocation1 [shape = 'u32[72,128]{1,0:T(1,128)}', space=vmem, size = 0x9000, scoped, tag = 'internal scratch']
  #allocation2 [shape = 'bf16[5,384]{1,0:T(8,128)(2,1)}', space=vmem, size = 0x1800, scoped, tag = 'scratch operand']
  #allocation3 [shape = 'bf16[88,128]{1,0:T(8,128)(2,1)}', space=vmem, size = 0x5800, scoped, tag = 'scratch operand']
  %s0 = inlined_call_operand.vmem [shape: bf16[2,5,128], index: 0, kind: input, shape index: {}]
  %s1 = inlined_call_operand.vmem [shape: bf16[48,88], index: 1, kind: input, shape index: {}]
  %s2 = inlined_call_operand.vmem [shape: f32[8,7], index: 2, kind: input, shape index: {}]
  %s3 = inlined_call_operand.vmem [shape: f32[8,1], index: 3, kind: input, shape index: {}]
  %s4 = inlined_call_operand.vmem [shape: f32[2,8,768], index: 4, kind: output, shape index: {}]
  %s5 = sld [smem:[#allocation0]]
  $region49: #{_lambda_.1} parent=0
    _
  %s7 = ssub.s32 1, %s5
  %s8 = scalar_select 0, %s7, %s5
  loop: start=0, step=1, limit=6
  $region2: #{_lambda_.1} parent=0 // loop_pre_header
    _
  $region3: #{_lambda_.1} parent=0 // loop_header
    %s10 = sphi 0, %s14
    %p11 = scmp.ge.s32.totalorder %s10, 6
    %s17 = sphi 0, %s29
    %s18 = sphi 0, %s25
    %s19 = sphi 0, %s17
    %s20 = sphi 0, %s18
    %s21 = sphi 0, %s19
    %s22 = sphi 0, %s20
    %s32 = sphi 0, %s34
    %s35 = sphi 0, %s32
    %s36 = sphi 0, %s35
    %s52 = sphi 0, %s36
    %s58 = sphi 0, %s60
    %s61 = sphi 0, %s58
    %s62 = sphi 0, %s61
    %s78 = sphi 0, %s62
    %s82 = sphi 0, %s82
    %s84 = sphi 0, %s82
    %s85 = sphi 0, %s84
    %s99 = sphi 0, %s85
    %s103 = sphi 0, %s103
    %s105 = sphi 0, %s103
    %s106 = sphi 0, %s105
    %s120 = sphi 0, %s106
    %s128 = sphi 0, %s130
    %s131 = sphi 0, %s128
    %s132 = sphi 0, %s131
    %s148 = sphi 0, %s132
  $region4: #{_lambda_.1} parent=0 // loop_header_branch
    %13 = sbr.rel (%p11) target = $region8
  $region5: #{_lambda_.1} parent=0 // loop_body
    %s15 = ssub.s32 %s10, 1
    %s16 = ssub.s32 %s10, 2
    %s23 = sadd.s32 1, %s18
    %p24 = scmp.ge.s32.totalorder %s23, 2
    %s25 = scalar_select %p24, 0, %s23
    %s26 = sadd.s32 1, %s17
    %s27 = scalar_select %p24, %s26, %s17
    %p28 = scmp.ge.s32.totalorder %s27, 2
    %s29 = scalar_select %p28, 0, %s27
    %s30 = ssub.s32 %s17, %s29
    %p31 = scmp.eq.s32.totalorder %s30, 0
    %s33 = sadd.s32 %s32, 1
    %s34 = scalar_select %p31, %s32, %s33
    %p37 = pneg %p31
    %p38 = scmp.eq.s32.totalorder %s10, 3
    %p39 = por %p37, %p38
    %p40 = scmp.ne.s32.totalorder %s32, %s35
    %p41 = scmp.eq.s32.totalorder %s10, 0
    %p42 = por %p40, %p41
    %p43 = scmp.ne.s32.totalorder %s32, %s35
    %p44 = scmp.eq.s32.totalorder %s15, 3
    %p45 = por %p43, %p44
    %p46 = scmp.ne.s32.totalorder %s35, %s36
    %p47 = scmp.eq.s32.totalorder %s15, 0
    %p48 = por %p46, %p47
    %p49 = scmp.ne.s32.totalorder %s35, %s36
    %p50 = scmp.eq.s32.totalorder %s16, 3
    %p51 = por %p49, %p50
    %p53 = scmp.ne.s32.totalorder %s36, %s52
    %p54 = scmp.eq.s32.totalorder %s16, 0
    %p55 = por %p53, %p54
    %s56 = ssub.s32 %s18, %s25
    %p57 = scmp.eq.s32.totalorder %s56, 0
    %s59 = sadd.s32 %s58, 1
    %s60 = scalar_select %p57, %s58, %s59
    %p63 = pneg %p57
    %p64 = scmp.eq.s32.totalorder %s10, 3
    %p65 = por %p63, %p64
    %p66 = scmp.ne.s32.totalorder %s58, %s61
    %p67 = scmp.eq.s32.totalorder %s10, 0
    %p68 = por %p66, %p67
    %p69 = scmp.ne.s32.totalorder %s58, %s61
    %p70 = scmp.eq.s32.totalorder %s15, 3
    %p71 = por %p69, %p70
    %p72 = scmp.ne.s32.totalorder %s61, %s62
    %p73 = scmp.eq.s32.totalorder %s15, 0
    %p74 = por %p72, %p73
    %p75 = scmp.ne.s32.totalorder %s61, %s62
    %p76 = scmp.eq.s32.totalorder %s16, 3
    %p77 = por %p75, %p76
    %p79 = scmp.ne.s32.totalorder %s62, %s78
    %p80 = scmp.eq.s32.totalorder %s16, 0
    %p81 = por %p79, %p80
    %s83 = sadd.s32 %s82, 1
    %p86 = scmp.eq.s32.totalorder %s10, 3
    %p87 = scmp.ne.s32.totalorder %s82, %s84
    %p88 = scmp.eq.s32.totalorder %s10, 0
    %p89 = por %p87, %p88
    %p90 = scmp.ne.s32.totalorder %s82, %s84
    %p91 = scmp.eq.s32.totalorder %s15, 3
    %p92 = por %p90, %p91
    %p93 = scmp.ne.s32.totalorder %s84, %s85
    %p94 = scmp.eq.s32.totalorder %s15, 0
    %p95 = por %p93, %p94
    %p96 = scmp.ne.s32.totalorder %s84, %s85
    %p97 = scmp.eq.s32.totalorder %s16, 3
    %p98 = por %p96, %p97
    %p100 = scmp.ne.s32.totalorder %s85, %s99
    %p101 = scmp.eq.s32.totalorder %s16, 0
    %p102 = por %p100, %p101
    %s104 = sadd.s32 %s103, 1
    %p107 = scmp.eq.s32.totalorder %s10, 3
    %p108 = scmp.ne.s32.totalorder %s103, %s105
    %p109 = scmp.eq.s32.totalorder %s10, 0
    %p110 = por %p108, %p109
    %p111 = scmp.ne.s32.totalorder %s103, %s105
    %p112 = scmp.eq.s32.totalorder %s15, 3
    %p113 = por %p111, %p112
    %p114 = scmp.ne.s32.totalorder %s105, %s106
    %p115 = scmp.eq.s32.totalorder %s15, 0
    %p116 = por %p114, %p115
    %p117 = scmp.ne.s32.totalorder %s105, %s106
    %p118 = scmp.eq.s32.totalorder %s16, 3
    %p119 = por %p117, %p118
    %p121 = scmp.ne.s32.totalorder %s106, %s120
    %p122 = scmp.eq.s32.totalorder %s16, 0
    %p123 = por %p121, %p122
    %s124 = ssub.s32 %s17, %s29
    %s125 = ssub.s32 %s18, %s25
    %s126 = sor.u32 %s124, %s125
    %p127 = scmp.eq.s32.totalorder %s126, 0
    %s129 = sadd.s32 %s128, 1
    %s130 = scalar_select %p127, %s128, %s129
    %p133 = pneg %p127
    %p134 = scmp.eq.s32.totalorder %s10, 3
    %p135 = por %p133, %p134
    %p136 = scmp.ne.s32.totalorder %s128, %s131
    %p137 = scmp.eq.s32.totalorder %s10, 0
    %p138 = por %p136, %p137
    %p139 = scmp.ne.s32.totalorder %s128, %s131
    %p140 = scmp.eq.s32.totalorder %s15, 3
    %p141 = por %p139, %p140
    %p142 = scmp.ne.s32.totalorder %s131, %s132
    %p143 = scmp.eq.s32.totalorder %s15, 0
    %p144 = por %p142, %p143
    %p145 = scmp.ne.s32.totalorder %s131, %s132
    %p146 = scmp.eq.s32.totalorder %s16, 3
    %p147 = por %p145, %p146
    %p149 = scmp.ne.s32.totalorder %s132, %s148
    %p150 = scmp.eq.s32.totalorder %s16, 0
    %p151 = por %p149, %p150
    %p152 = scmp.le.s32.totalorder 1, %s10
    %p153 = scmp.lt.s32.totalorder %s10, 5
    %p154 = pnand %p152, %p153
    %p155 = pneg %p154
    // Predicated region
    $region9: #{_lambda_.1} parent=5 // pred_check
      _
    $region10: #{_lambda_.1} parent=5 // pred_check_branch
      %157 = sbr.rel (%p154) target = $region12
    $region11: #{_lambda_.1} parent=5 // pred_region
      %s158 = ssub.s32 %s10, 1
      // Predicated region
      $region13: #{_lambda_.1} parent=11 // pred_check
        %p159 = pneg %p95
      $region14: #{_lambda_.1} parent=11 // pred_check_branch
        %161 = sbr.rel (%p159) target = $region16
      $region15: #{_lambda_.1} parent=11 // pred_region
        _
      $region16: #{_lambda_.1} parent=11 // pred_fallthru
        _
      // Predicated region
      $region17: #{_lambda_.1} parent=11 // pred_check
        %p162 = pneg %p116
      $region18: #{_lambda_.1} parent=11 // pred_check_branch
        %164 = sbr.rel (%p162) target = $region20
      $region19: #{_lambda_.1} parent=11 // pred_region
        _
      $region20: #{_lambda_.1} parent=11 // pred_fallthru
        _
    $region12: #{_lambda_.1} parent=5 // pred_fallthru
      _
    %p165 = scmp.lt.s32.totalorder %s10, 4
    // Predicated region
    $region21: #{_lambda_.1} parent=5 // pred_check
      %p166 = pneg %p165
    $region22: #{_lambda_.1} parent=5 // pred_check_branch
      %168 = sbr.rel (%p166) target = $region24
    $region23: #{_lambda_.1} parent=5 // pred_region
      // Predicated region
      $region25: #{_lambda_.1} parent=23 // pred_check
        %p169 = pneg %p42
      $region26: #{_lambda_.1} parent=23 // pred_check_branch
        %171 = sbr.rel (%p169) target = $region28
      $region27: #{_lambda_.1} parent=23 // pred_region
        %p172 = scmp.lt.s32.totalorder %s17, 1
        %s173 = scalar_select %p172, %s17, 1
        %s174 = smul.addr %s173, 4
        %s175 = scalar_lea.vmem %s0, %s174
      $region28: #{_lambda_.1} parent=23 // pred_fallthru
        _
      // Predicated region
      $region29: #{_lambda_.1} parent=23 // pred_check
        %p176 = pneg %p68
      $region30: #{_lambda_.1} parent=23 // pred_check_branch
        %178 = sbr.rel (%p176) target = $region32
      $region31: #{_lambda_.1} parent=23 // pred_region
        %s179 = smul.u32 3, %s18
        %p180 = scmp.lt.s32.totalorder %s179, 5
        %s181 = scalar_select %p180, %s179, 5
        %s182 = smul.addr %s181, 4
        %s183 = scalar_lea.vmem %s1, %s182
        %s184 = smul.u32 3, %s18
      $region32: #{_lambda_.1} parent=23 // pred_fallthru
        _
    $region24: #{_lambda_.1} parent=5 // pred_fallthru
      _
    %p185 = scmp.le.s32.totalorder 1, %s10
    %p186 = scmp.lt.s32.totalorder %s10, 5
    %p187 = pnand %p185, %p186
    %p188 = pneg %p187
    // Predicated region
    $region33: #{_lambda_.1} parent=5 // pred_check
      _
    $region34: #{_lambda_.1} parent=5 // pred_check_branch
      %190 = sbr.rel (%p187) target = $region36
    $region35: #{_lambda_.1} parent=5 // pred_region
      %s191 = ssub.s32 %s10, 1
      %p192 = scmp.lt.s32.totalorder %s19, 1
      %s193 = scalar_select %p192, %s19, 1
      %s194 = smul.addr %s193, 4
      %s195 = scalar_lea.vmem %s0, %s194
      %p196 = pneg %p48
      %p197 = pneg %p45
      %s198 = smul.u32 3, %s20
      %p199 = scmp.lt.s32.totalorder %s198, 5
      %s200 = scalar_select %p199, %s198, 5
      %s201 = smul.addr %s200, 4
      %s202 = scalar_lea.vmem %s1, %s201
      %p203 = pneg %p74
      %p204 = pneg %p71
      %p205 = pneg %p95
      %p206 = pneg %p92
      %p207 = pneg %p116
      %p208 = pneg %p113
      %p209 = pneg %p144
      %p210 = pneg %p141
      %s211 = smul.u32 3, %s20
      %p212 = scmp.lt.s32.totalorder %s19, 1
      %s213 = scalar_select %p212, %s19, 1
      %p214 = scmp.lt.s32.totalorder %s211, 5
      %s215 = scalar_select %p214, %s211, 5
      %s216 = smul.addr %s213, 6
      %s217 = sadd.s32 %s215, %s216
      %s218 = smul.addr %s217, 8
      %s219 = scalar_lea.vmem %s4, %s218
      %p220 = scmp.lt.s32.totalorder %s19, 1
      %s221 = scalar_select %p220, %s19, 1
      %s222 = smul.addr %s221, 4
      %s223 = scalar_lea.vmem %s0, %s222
      %s224 = smul.u32 3, %s20
      %p225 = scmp.lt.s32.totalorder %s224, 5
      %s226 = scalar_select %p225, %s224, 5
      %s227 = smul.addr %s226, 4
      %s228 = scalar_lea.vmem %s1, %s227
      %s229 = smul.u32 3, %s20
      %s230 = smul.u32 3, %s20
      %p231 = scmp.lt.s32.totalorder %s19, 1
      %s232 = scalar_select %p231, %s19, 1
      %p233 = scmp.lt.s32.totalorder %s230, 5
      %s234 = scalar_select %p233, %s230, 5
      %s235 = smul.addr %s232, 6
      %s236 = sadd.s32 %s234, %s235
      %s237 = smul.addr %s236, 8
      %s238 = scalar_lea.vmem %s4, %s237
      %s239 = smul.u32 3, %s20
      %vm244 = vcmask 1042432
      %vm245 = vsmask.f32 2304
      %vm246 = vmand %vm244, %vm245
      %v247 = vld [vmem:[#allocation2] sm:$0x7]
      %v248 = vsel %vm246, 0, %v247
      %249 = vst [vmem:[#allocation2] sm:$0x7] %v248
      %v250 = vld [vmem:[#allocation2 + $0x8] sm:$0x7]
      %v251 = vsel %vm246, 0, %v250
      %252 = vst [vmem:[#allocation2 + $0x8] sm:$0x7] %v251
      %v253 = vld [vmem:[%s223] sm:$0x7]
      %v254 = vld [vmem:[#allocation2 + $0x4] sm:$0x7]
      %v255 = vsel %vm246, %v253, %v254
      %256 = vst [vmem:[#allocation2 + $0x4] sm:$0x7] %v255
      %v257 = vlaneseq
      %v258 = vand.u32 %v257, 127
      %vm259 = vcmp.lt.s32.totalorder %v258, 0
      %v260 = vsub.s32 0, %v258
      %v261 = vsel %vm259, %v260, %v258
      %v262 = vshrl.u32 %v261, 4
      %v263 = vand.u32 %v261, 15
      %v264 = vsub.s32 0, %v263
      %v265 = vsel %vm259, %v264, %v263
      %vm266 = vcmp.ne.s32.totalorder %v265, 0
      %vm267 = vcmp.lt.s32.totalorder %v265, 0
      %vm268 = vmand %vm267, %vm266
      %v269 = vadd.s32 %v265, 16
      %v270 = vsel %vm268, %v269, %v265
      %v271 = vld [vmem:[#allocation2] sm:$0x33]
      %vm272 = vcmp.ge.s32.totalorder %v270, 1
      %vm273 = vmpackc.low %vm272, %vm272
      %v274 = vsel %vm273, 65537, 0
      %275 = vrot.lane.b32.xlu0 %v274, 111
      %v276 = vpop.permute.xlu0 %275
      %v277 = vrot.slane %v276, 4
      %vm278 = vcmask 908288
      %v279 = vsel %vm278, %v277, %v276
      %v280 = vunpack.c.l.b16 %v279
      %v281 = vunpack.c.h.b16 %v279
      %v282 = vunpack.c.l.b16 0
      %v283 = vunpack.c.h.b16 0
      %vm284 = vcmp.ne.s32.totalorder %v280, %v282
      %vm285 = vcmp.ne.s32.totalorder %v281, %v283
      %vm286 = vmpackc.low %vm285, %vm284
      %v287 = vsel %vm286, %v271, 0
      %289 = vrot.lane.b32.xlu0 %v287, 17
      %v290 = vpop.permute.xlu0 %289
      %v291 = vrot.slane %v290, 4
      %vm292 = vcmask 138240
      %v293 = vsel %vm292, %v290, %v291
      %vm295 = vcmask 1041408
      %vm296 = vsmask.f32 1280
      %vm297 = vmand %vm295, %vm296
      %v298 = vld [vmem:[#allocation3] sm:$0x3]
      %v299 = vsel %vm297, %v293, %v298
      %300 = vst [vmem:[#allocation3] sm:$0x3] %v299
      %v301 = vld [vmem:[#allocation2] sm:$0x33]
      %v303 = vshrl.u32 %v301, 16
      %v305 = vrot.slane %v303, 6
      %v306 = vshll.u32 %v301, 16
      %v308 = vrot.slane %v306, 7
      %v309 = vor.u32 %v305, %v308
      %310 = vrot.lane.b32.xlu0 %v309, 16
      %v311 = vpop.permute.xlu0 %310
      %v312 = vrot.slane %v311, 4
      %vm313 = vcmask 130048
      %v314 = vsel %vm313, %v311, %v312
      %vm316 = vcmask 1042433
      %vm317 = vsmask.f32 7942
      %vm318 = vmand %vm316, %vm317
      %v319 = vld [vmem:[#allocation3] sm:$0x6]
      %v320 = vsel %vm318, %v314, %v319
      %321 = vst [vmem:[#allocation3] sm:$0x6] %v320
      %v322 = vld [vmem:[#allocation2] sm:$0x33]
      %vm323 = vcmp.lt.s32.totalorder %v270, 15
      %vm324 = vmpackc.low %vm323, %vm323
      %v325 = vsel %vm324, 65537, 0
      %326 = vrot.lane.b32.xlu0 %v325, 113
      %v327 = vpop.permute.xlu0 %326
      %v328 = vrot.slane %v327, 4
      %vm329 = vcmask 924672
      %v330 = vsel %vm329, %v328, %v327
      %v331 = vunpack.c.l.b16 %v330
      %v332 = vunpack.c.h.b16 %v330
      %v333 = vunpack.c.l.b16 0
      %v334 = vunpack.c.h.b16 0
      %vm335 = vcmp.ne.s32.totalorder %v331, %v333
      %vm336 = vcmp.ne.s32.totalorder %v332, %v334
      %vm337 = vmpackc.low %vm336, %vm335
      %v338 = vsel %vm337, %v322, 0
      %v340 = vrot.slane %v338, 5
      %v341 = vrot.slane %v340, 4
      %342 = vrot.lane.b32.xlu0 %v340, 15
      %v343 = vpop.permute.xlu0 %342
      %344 = vrot.lane.b32.xlu0 %v341, 15
      %v345 = vpop.permute.xlu0 %344
      %v346 = vrot.slane %v343, 4
      %v347 = vrot.slane %v345, 4
      %vm348 = vcmask 121856
      %v349 = vsel %vm348, %v343, %v346
      %v350 = vsel %vm348, %v345, %v347
      %353 = vst [vmem:[#allocation3] sm:$0x8] %v349
      %vm354 = vcmask 1040384
      %vm355 = vsmask.f32 256
      %vm356 = vmand %vm354, %vm355
      %v357 = vld [vmem:[#allocation3 + $0x4] sm:$0x1]
      %v358 = vsel %vm356, %v350, %v357
      %359 = vst [vmem:[#allocation3 + $0x4] sm:$0x1] %v358
      %v360 = vld [vmem:[#allocation2] sm:$0x33]
      %361 = vrot.lane.b32.xlu0 %v274, 127
      %v362 = vpop.permute.xlu0 %361
      %v363 = vrot.slane %v362, 4
      %vm364 = vcmask 1039360
      %v365 = vsel %vm364, %v363, %v362
      %v366 = vunpack.c.l.b16 %v365
      %v367 = vunpack.c.h.b16 %v365
      %v368 = vunpack.c.l.b16 0
      %v369 = vunpack.c.h.b16 0
      %vm370 = vcmp.ne.s32.totalorder %v366, %v368
      %vm371 = vcmp.ne.s32.totalorder %v367, %v369
      %vm372 = vmpackc.low %vm371, %vm370
      %v373 = vsel %vm372, %v360, 0
      %v375 = vshrl.u32 %v373, 16
      %v377 = vrot.slane %v375, 7
      %v378 = vshll.u32 %v373, 16
      %v380 = vor.u32 %v377, %v378
      %381 = vrot.lane.b32.xlu0 %v380, 1
      %v382 = vpop.permute.xlu0 %381
      %v383 = vrot.slane %v382, 4
      %vm384 = vcmask 7168
      %v385 = vsel %vm384, %v382, %v383
      %vm387 = vsmask.f32 7938
      %vm388 = vmand %vm295, %vm387
      %v389 = vld [vmem:[#allocation3 + $0x4] sm:$0x3]
      %v390 = vsel %vm388, %v385, %v389
      %391 = vst [vmem:[#allocation3 + $0x4] sm:$0x3] %v390
      %v392 = vld [vmem:[#allocation2 + $0x4] sm:$0x3]
      %v394 = vrot.slane %v392, 6
      %vm396 = vcmask 1043458
      %vm397 = vsmask.f32 3328
      %vm398 = vmand %vm396, %vm397
      %v399 = vld [vmem:[#allocation3 + $0x4] sm:$0xc]
      %v400 = vsel %vm398, %v394, %v399
      %401 = vst [vmem:[#allocation3 + $0x4] sm:$0xc] %v400
      %v402 = vld [vmem:[#allocation2 + $0x4] sm:$0x33]
      %403 = vrot.lane.b32.xlu0 %v325, 1
      %v404 = vpop.permute.xlu0 %403
      %v405 = vrot.slane %v404, 4
      %v406 = vsel %vm384, %v405, %v404
      %v407 = vunpack.c.l.b16 %v406
      %v408 = vunpack.c.h.b16 %v406
      %v409 = vunpack.c.l.b16 0
      %v410 = vunpack.c.h.b16 0
      %vm411 = vcmp.ne.s32.totalorder %v407, %v409
      %vm412 = vcmp.ne.s32.totalorder %v408, %v410
      %vm413 = vmpackc.low %vm412, %vm411
      %v414 = vsel %vm413, %v402, 0
      %v416 = vshll.u32 %v414, 16
      %v418 = vrot.slane %v416, 5
      %v419 = vshrl.u32 %v414, 16
      %v421 = vrot.slane %v419, 4
      %v422 = vor.u32 %v421, %v418
      %v423 = vrot.slane %v422, 4
      %424 = vrot.lane.b32.xlu0 %v418, 127
      %v425 = vpop.permute.xlu0 %424
      %426 = vrot.lane.b32.xlu0 %v423, 127
      %v427 = vpop.permute.xlu0 %426
      %v428 = vrot.slane %v425, 4
      %v429 = vrot.slane %v427, 4
      %v430 = vsel %vm364, %v425, %v428
      %v431 = vsel %vm364, %v427, %v429
      %vm434 = vcmask 1043459
      %vm435 = vsmask.f32 7950
      %vm436 = vmand %vm434, %vm435
      %v437 = vld [vmem:[#allocation3 + $0x4] sm:$0x8]
      %v438 = vsel %vm436, %v430, %v437
      %439 = vst [vmem:[#allocation3 + $0x4] sm:$0x8] %v438
      %440 = vst [vmem:[#allocation3 + $0x8] sm:$0x1] %v431
      %v441 = vld [vmem:[#allocation2 + $0x4] sm:$0x33]
      %442 = vrot.lane.b32.xlu0 %v274, 15
      %v443 = vpop.permute.xlu0 %442
      %v444 = vrot.slane %v443, 4
      %v445 = vsel %vm348, %v444, %v443
      %v446 = vunpack.c.l.b16 %v445
      %v447 = vunpack.c.h.b16 %v445
      %v448 = vunpack.c.l.b16 0
      %v449 = vunpack.c.h.b16 0
      %vm450 = vcmp.ne.s32.totalorder %v446, %v448
      %vm451 = vcmp.ne.s32.totalorder %v447, %v449
      %vm452 = vmpackc.low %vm451, %vm450
      %v453 = vsel %vm452, %v441, 0
      %v455 = vrot.slane %v453, 7
      %456 = vrot.lane.b32.xlu0 %v455, 113
      %v457 = vpop.permute.xlu0 %456
      %v458 = vrot.slane %v457, 4
      %v459 = vsel %vm329, %v457, %v458
      %vm461 = vmand %vm316, %vm245
      %v462 = vld [vmem:[#allocation3 + $0x8] sm:$0x6]
      %v463 = vsel %vm461, %v459, %v462
      %464 = vst [vmem:[#allocation3 + $0x8] sm:$0x6] %v463
      %v465 = vld [vmem:[#allocation2 + $0x4] sm:$0x33]
      %v467 = vshrl.u32 %v465, 16
      %v469 = vrot.slane %v467, 5
      %v470 = vshll.u32 %v465, 16
      %v472 = vrot.slane %v470, 6
      %v473 = vor.u32 %v469, %v472
      %474 = vrot.lane.b32.xlu0 %v473, 112
      %v475 = vpop.permute.xlu0 %474
      %v476 = vrot.slane %v475, 4
      %vm477 = vcmask 916480
      %v478 = vsel %vm477, %v475, %v476
      %vm480 = vsmask.f32 7946
      %vm481 = vmand %vm396, %vm480
      %v482 = vld [vmem:[#allocation3 + $0x8] sm:$0xc]
      %v483 = vsel %vm481, %v478, %v482
      %484 = vst [vmem:[#allocation3 + $0x8] sm:$0xc] %v483
      %v485 = vld [vmem:[#allocation2 + $0x4] sm:$0x33]
      %486 = vrot.lane.b32.xlu0 %v325, 17
      %v487 = vpop.permute.xlu0 %486
      %v488 = vrot.slane %v487, 4
      %v489 = vsel %vm292, %v488, %v487
      %v490 = vunpack.c.l.b16 %v489
      %v491 = vunpack.c.h.b16 %v489
      %v492 = vunpack.c.l.b16 0
      %v493 = vunpack.c.h.b16 0
      %vm494 = vcmp.ne.s32.totalorder %v490, %v492
      %vm495 = vcmp.ne.s32.totalorder %v491, %v493
      %vm496 = vmpackc.low %vm495, %vm494
      %v497 = vsel %vm496, %v485, 0
      %499 = vrot.lane.b32.xlu0 %v497, 111
      %v500 = vpop.permute.xlu0 %499
      %v501 = vrot.slane %v500, 4
      %v502 = vsel %vm278, %v500, %v501
      %v504 = vld [vmem:[#allocation3 + $0xc] sm:$0x3]
      %v505 = vsel %vm297, %v502, %v504
      %506 = vst [vmem:[#allocation3 + $0xc] sm:$0x3] %v505
      %v507 = vld [vmem:[#allocation2] sm:$0x33]
      %v508 = vsel %vm286, %v507, 0
      %v510 = vrot.slane %v508, 7
      %511 = vrot.lane.b32.xlu0 %v510, 17
      %v512 = vpop.permute.xlu0 %511
      %v513 = vrot.slane %v512, 4
      %v514 = vsel %vm292, %v512, %v513
      %v516 = vld [vmem:[#allocation3 + $0xc] sm:$0x6]
      %v517 = vsel %vm318, %v514, %v516
      %518 = vst [vmem:[#allocation3 + $0xc] sm:$0x6] %v517
      %v519 = vld [vmem:[#allocation2] sm:$0x33]
      %v521 = vshrl.u32 %v519, 16
      %v523 = vrot.slane %v521, 5
      %v524 = vshll.u32 %v519, 16
      %v526 = vrot.slane %v524, 6
      %v527 = vor.u32 %v523, %v526
      %v528 = vrot.slane %v523, 4
      %529 = vrot.lane.b32.xlu0 %v527, 16
      %v530 = vpop.permute.xlu0 %529
      %531 = vrot.lane.b32.xlu0 %v528, 16
      %v532 = vpop.permute.xlu0 %531
      %v533 = vrot.slane %v530, 4
      %v534 = vrot.slane %v532, 4
      %v535 = vsel %vm313, %v530, %v533
      %v536 = vsel %vm313, %v532, %v534
      %539 = vst [vmem:[#allocation3 + $0xc] sm:$0x8] %v535
      %v540 = vld [vmem:[#allocation3 + $0x10] sm:$0x1]
      %v541 = vsel %vm356, %v536, %v540
      %542 = vst [vmem:[#allocation3 + $0x10] sm:$0x1] %v541
      %v543 = vld [vmem:[#allocation2] sm:$0x33]
      %v544 = vsel %vm337, %v543, 0
      %546 = vrot.lane.b32.xlu0 %v544, 15
      %v547 = vpop.permute.xlu0 %546
      %v548 = vrot.slane %v547, 4
      %v549 = vsel %vm348, %v547, %v548
      %v551 = vld [vmem:[#allocation3 + $0x10] sm:$0x3]
      %v552 = vsel %vm388, %v549, %v551
      %553 = vst [vmem:[#allocation3 + $0x10] sm:$0x3] %v552
      %v554 = vld [vmem:[#allocation2] sm:$0x33]
      %v555 = vsel %vm372, %v554, 0
      %v557 = vshrl.u32 %v555, 16
      %v559 = vrot.slane %v557, 6
      %v560 = vshll.u32 %v555, 16
      %v562 = vrot.slane %v560, 7
      %v563 = vor.u32 %v559, %v562
      %564 = vrot.lane.b32.xlu0 %v563, 1
      %v565 = vpop.permute.xlu0 %564
      %v566 = vrot.slane %v565, 4
      %v567 = vsel %vm384, %v565, %v566
      %v569 = vld [vmem:[#allocation3 + $0x10] sm:$0xc]
      %v570 = vsel %vm398, %v567, %v569
      %571 = vst [vmem:[#allocation3 + $0x10] sm:$0xc] %v570
      %v572 = vld [vmem:[#allocation2 + $0x4] sm:$0x3]
      %v574 = vrot.slane %v572, 5
      %v575 = vrot.slane %v574, 4
      %v578 = vld [vmem:[#allocation3 + $0x10] sm:$0x8]
      %v579 = vsel %vm436, %v574, %v578
      %580 = vst [vmem:[#allocation3 + $0x10] sm:$0x8] %v579
      %581 = vst [vmem:[#allocation3 + $0x14] sm:$0x1] %v575
      %v582 = vld [vmem:[#allocation2 + $0x4] sm:$0x33]
      %v583 = vsel %vm413, %v582, 0
      %v585 = vshrl.u32 %v583, 16
      %v587 = vrot.slane %v585, 7
      %v588 = vshll.u32 %v583, 16
      %v590 = vor.u32 %v587, %v588
      %591 = vrot.lane.b32.xlu0 %v590, 127
      %v592 = vpop.permute.xlu0 %591
      %v593 = vrot.slane %v592, 4
      %v594 = vsel %vm364, %v592, %v593
      %v596 = vld [vmem:[#allocation3 + $0x14] sm:$0x6]
      %v597 = vsel %vm461, %v594, %v596
      %598 = vst [vmem:[#allocation3 + $0x14] sm:$0x6] %v597
      %v599 = vld [vmem:[#allocation2 + $0x4] sm:$0x33]
      %v600 = vsel %vm452, %v599, 0
      %v602 = vrot.slane %v600, 6
      %603 = vrot.lane.b32.xlu0 %v602, 113
      %v604 = vpop.permute.xlu0 %603
      %v605 = vrot.slane %v604, 4
      %v606 = vsel %vm329, %v604, %v605
      %v608 = vld [vmem:[#allocation3 + $0x14] sm:$0xc]
      %v609 = vsel %vm481, %v606, %v608
      %610 = vst [vmem:[#allocation3 + $0x14] sm:$0xc] %v609
      %v611 = vld [vmem:[#allocation2 + $0x4] sm:$0x33]
      %v613 = vshrl.u32 %v611, 16
      %v615 = vrot.slane %v613, 4
      %v616 = vshll.u32 %v611, 16
      %v618 = vrot.slane %v616, 5
      %v619 = vor.u32 %v615, %v618
      %v620 = vrot.slane %v619, 4
      %621 = vrot.lane.b32.xlu0 %v620, 112
      %v622 = vpop.permute.xlu0 %621
      %v623 = vrot.slane %v622, 4
      %v624 = vsel %vm477, %v622, %v623
      %v626 = vld [vmem:[#allocation3 + $0x18] sm:$0x3]
      %v627 = vsel %vm297, %v624, %v626
      %628 = vst [vmem:[#allocation3 + $0x18] sm:$0x3] %v627
      %v629 = vld [vmem:[#allocation2 + $0x4] sm:$0x33]
      %v630 = vsel %vm496, %v629, 0
      %v632 = vrot.slane %v630, 7
      %633 = vrot.lane.b32.xlu0 %v632, 111
      %v634 = vpop.permute.xlu0 %633
      %v635 = vrot.slane %v634, 4
      %v636 = vsel %vm278, %v634, %v635
      %v638 = vld [vmem:[#allocation3 + $0x18] sm:$0x6]
      %v639 = vsel %vm318, %v636, %v638
      %640 = vst [vmem:[#allocation3 + $0x18] sm:$0x6] %v639
      %v641 = vld [vmem:[#allocation2] sm:$0x66]
      %v642 = vsel %vm286, %v641, 0
      %v644 = vrot.slane %v642, 6
      %v645 = vrot.slane %v644, 4
      %646 = vrot.lane.b32.xlu0 %v644, 17
      %v647 = vpop.permute.xlu0 %646
      %648 = vrot.lane.b32.xlu0 %v645, 17
      %v649 = vpop.permute.xlu0 %648
      %v650 = vrot.slane %v647, 4
      %v651 = vrot.slane %v649, 4
      %v652 = vsel %vm292, %v647, %v650
      %v653 = vsel %vm292, %v649, %v651
      %656 = vst [vmem:[#allocation3 + $0x18] sm:$0x8] %v652
      %v657 = vld [vmem:[#allocation3 + $0x1c] sm:$0x1]
      %v658 = vsel %vm356, %v653, %v657
      %659 = vst [vmem:[#allocation3 + $0x1c] sm:$0x1] %v658
      %v660 = vld [vmem:[#allocation2] sm:$0x66]
      %v662 = vshrl.u32 %v660, 16
      %v664 = vrot.slane %v662, 4
      %v665 = vshll.u32 %v660, 16
      %v667 = vrot.slane %v665, 5
      %v668 = vor.u32 %v664, %v667
      %v669 = vrot.slane %v668, 4
      %670 = vrot.lane.b32.xlu0 %v669, 16
      %v671 = vpop.permute.xlu0 %670
      %v672 = vrot.slane %v671, 4
      %v673 = vsel %vm313, %v671, %v672
      %v675 = vld [vmem:[#allocation3 + $0x1c] sm:$0x3]
      %v676 = vsel %vm388, %v673, %v675
      %677 = vst [vmem:[#allocation3 + $0x1c] sm:$0x3] %v676
      %v678 = vld [vmem:[#allocation2] sm:$0x66]
      %v679 = vsel %vm337, %v678, 0
      %v681 = vrot.slane %v679, 7
      %682 = vrot.lane.b32.xlu0 %v681, 15
      %v683 = vpop.permute.xlu0 %682
      %v684 = vrot.slane %v683, 4
      %v685 = vsel %vm348, %v683, %v684
      %v687 = vld [vmem:[#allocation3 + $0x1c] sm:$0xc]
      %v688 = vsel %vm398, %v685, %v687
      %689 = vst [vmem:[#allocation3 + $0x1c] sm:$0xc] %v688
      %v690 = vld [vmem:[#allocation2] sm:$0x66]
      %v691 = vsel %vm372, %v690, 0
      %v693 = vshll.u32 %v691, 16
      %v695 = vrot.slane %v693, 6
      %v696 = vshrl.u32 %v691, 16
      %v698 = vrot.slane %v696, 5
      %v699 = vor.u32 %v698, %v695
      %v700 = vrot.slane %v699, 4
      %701 = vrot.lane.b32.xlu0 %v695, 1
      %v702 = vpop.permute.xlu0 %701
      %703 = vrot.lane.b32.xlu0 %v700, 1
      %v704 = vpop.permute.xlu0 %703
      %v705 = vrot.slane %v702, 4
      %v706 = vrot.slane %v704, 4
      %v707 = vsel %vm384, %v702, %v705
      %v708 = vsel %vm384, %v704, %v706
      %v711 = vld [vmem:[#allocation3 + $0x1c] sm:$0x8]
      %v712 = vsel %vm436, %v707, %v711
      %713 = vst [vmem:[#allocation3 + $0x1c] sm:$0x8] %v712
      %714 = vst [vmem:[#allocation3 + $0x20] sm:$0x1] %v708
      %v715 = vld [vmem:[#allocation2 + $0x4] sm:$0x6]
      %v716 = vld [vmem:[#allocation3 + $0x20] sm:$0x6]
      %v717 = vsel %vm461, %v715, %v716
      %718 = vst [vmem:[#allocation3 + $0x20] sm:$0x6] %v717
      %v719 = vld [vmem:[#allocation2 + $0x4] sm:$0x66]
      %v720 = vsel %vm413, %v719, 0
      %v722 = vshrl.u32 %v720, 16
      %v724 = vrot.slane %v722, 6
      %v725 = vshll.u32 %v720, 16
      %v727 = vrot.slane %v725, 7
      %v728 = vor.u32 %v724, %v727
      %729 = vrot.lane.b32.xlu0 %v728, 127
      %v730 = vpop.permute.xlu0 %729
      %v731 = vrot.slane %v730, 4
      %v732 = vsel %vm364, %v730, %v731
      %v734 = vld [vmem:[#allocation3 + $0x20] sm:$0xc]
      %v735 = vsel %vm481, %v732, %v734
      %736 = vst [vmem:[#allocation3 + $0x20] sm:$0xc] %v735
      %v737 = vld [vmem:[#allocation2 + $0x4] sm:$0x66]
      %v738 = vsel %vm452, %v737, 0
      %v740 = vrot.slane %v738, 5
      %v741 = vrot.slane %v740, 4
      %742 = vrot.lane.b32.xlu0 %v741, 113
      %v743 = vpop.permute.xlu0 %742
      %v744 = vrot.slane %v743, 4
      %v745 = vsel %vm329, %v743, %v744
      %v747 = vld [vmem:[#allocation3 + $0x24] sm:$0x3]
      %v748 = vsel %vm297, %v745, %v747
      %749 = vst [vmem:[#allocation3 + $0x24] sm:$0x3] %v748
      %v750 = vld [vmem:[#allocation2 + $0x4] sm:$0x66]
      %v752 = vshrl.u32 %v750, 16
      %v754 = vrot.slane %v752, 7
      %v755 = vshll.u32 %v750, 16
      %v757 = vor.u32 %v754, %v755
      %758 = vrot.lane.b32.xlu0 %v757, 112
      %v759 = vpop.permute.xlu0 %758
      %v760 = vrot.slane %v759, 4
      %v761 = vsel %vm477, %v759, %v760
      %v763 = vld [vmem:[#allocation3 + $0x24] sm:$0x6]
      %v764 = vsel %vm318, %v761, %v763
      %765 = vst [vmem:[#allocation3 + $0x24] sm:$0x6] %v764
      %v766 = vld [vmem:[#allocation2 + $0x4] sm:$0x66]
      %v767 = vsel %vm496, %v766, 0
      %v769 = vrot.slane %v767, 6
      %v770 = vrot.slane %v769, 4
      %771 = vrot.lane.b32.xlu0 %v769, 111
      %v772 = vpop.permute.xlu0 %771
      %773 = vrot.lane.b32.xlu0 %v770, 111
      %v774 = vpop.permute.xlu0 %773
      %v775 = vrot.slane %v772, 4
      %v776 = vrot.slane %v774, 4
      %v777 = vsel %vm278, %v772, %v775
      %v778 = vsel %vm278, %v774, %v776
      %781 = vst [vmem:[#allocation3 + $0x24] sm:$0x8] %v777
      %v782 = vld [vmem:[#allocation3 + $0x28] sm:$0x1]
      %v783 = vsel %vm356, %v778, %v782
      %784 = vst [vmem:[#allocation3 + $0x28] sm:$0x1] %v783
      %vm785 = vmand %vm354, %vm387
      %v786 = vld [vmem:[#allocation3 + $0x28] sm:$0x1]
      %v787 = vsel %vm785, 1065369472, %v786
      %788 = vst [vmem:[#allocation3 + $0x28] sm:$0x1] %v787
      %789 = vst [vmem:[#allocation3 + $0x28] sm:$0xe] 0
      %v790 = vld [vmem:[%s228] sm:$0xf]
      %v791 = vld [vmem:[%s228 + $0x4] sm:$0xf]
      %v792 = vld [vmem:[%s228 + $0x8] sm:$0xf]
      %v793 = vld [vmem:[#allocation3] sm:$0xf]
      %v794 = vld [vmem:[#allocation3 + $0x4] sm:$0xf]
      %v795 = vld [vmem:[#allocation3 + $0x8] sm:$0xf]
      %v796 = vld [vmem:[#allocation3 + $0xc] sm:$0xf]
      %v797 = vld [vmem:[#allocation3 + $0x10] sm:$0xf]
      %v798 = vld [vmem:[#allocation3 + $0x14] sm:$0xf]
      %v799 = vld [vmem:[#allocation3 + $0x18] sm:$0xf]
      %v800 = vld [vmem:[#allocation3 + $0x1c] sm:$0xf]
      %v801 = vld [vmem:[#allocation3 + $0x20] sm:$0xf]
      %v802 = vld [vmem:[#allocation3 + $0x24] sm:$0xf]
      %v803 = vld [vmem:[#allocation3 + $0x28] sm:$0xf]
      %v807 = vunpack.c.l.b16 %v790
      %v808 = vunpack.c.l.b16 %v791
      %v809 = vunpack.c.l.b16 %v792
      %v810 = vpack.c.b16 %v808, %v807
      %v811 = vpack.c.b16 %v809, %v809
      %v823 = vunpack.c.l.b16 %v793
      %v824 = vunpack.c.l.b16 %v794
      %v825 = vunpack.c.l.b16 %v795
      %v826 = vunpack.c.l.b16 %v796
      %v827 = vunpack.c.l.b16 %v797
      %v828 = vunpack.c.l.b16 %v798
      %v829 = vunpack.c.l.b16 %v799
      %v830 = vunpack.c.l.b16 %v800
      %v831 = vunpack.c.l.b16 %v801
      %v832 = vunpack.c.l.b16 %v802
      %v833 = vunpack.c.l.b16 %v803
      %v834 = vpack.c.b16 %v824, %v823
      %v835 = vpack.c.b16 %v826, %v825
      %v836 = vpack.c.b16 %v828, %v827
      %v837 = vpack.c.b16 %v830, %v829
      %v838 = vpack.c.b16 %v832, %v831
      %v839 = vpack.c.b16 %v833, %v833
      %vm845 = vcmask 719872
      %v847 = vsel %vm845, %v810, 0
      %v850 = vsel %vm845, %v811, 0
      %vm852 = vcmask 1043456
      %v854 = vsel %vm852, %v839, 0
      %856 = vmatpush.bf16.msra.mxu0 0
      %857 = vmatpush.bf16.msra.mxu0 0
      %858 = vmatpush.bf16.msra.mxu0 %v854
      %859 = vmatpush.bf16.msra.mxu0 %v838
      %860 = vmatpush.bf16.msra.mxu0 %v837
      %861 = vmatpush.bf16.msra.mxu0 %v836
      %862 = vmatpush.bf16.msra.mxu0 %v835
      %863 = vmatpush.bf16.msra.mxu0 %v834
      %864 = vmatmul.bf16.gmra.mxu0 %v847
      %v865 = vpop.f32.mrf.mxu0
      %v866 = vadd.f32 0.0, %v865
      %v867 = vpop.f32.mrf.mxu0
      %v868 = vadd.f32 0.0, %v867
      %869 = vmatmul.bf16.gmra.mxu0 %v850
      %v870 = vpop.f32.mrf.mxu0
      %v871 = vadd.f32 0.0, %v870
      %v872 = vpop.f32.mrf.mxu0
      %873 = vdwg.mxu0
      %v874 = vld [vmem:[%s3] sm:$0xff]
      %876 = vset.pattern.permute.xlu0 0
      %877 = vperm.xlu0 %876, %v874
      %v878 = vpop.permute.xlu0 %877
      %v880 = vld [vmem:[%s2] sm:$0xff]
      %vm881 = vcmask 56320
      %v883 = vsel %vm881, %v880, 0
      %vm885 = vcmask 1046528
      %v887 = vsel %vm885, %v866, 0
      %889 = vmatpush.msra.mxu0 0.0
      %890 = vmatpush.msra.mxu0 0.0
      %891 = vmatpush.msra.mxu0 0.0
      %892 = vmatpush.msra.mxu0 0.0
      %893 = vmatpush.msra.mxu0 0.0
      %894 = vmatpush.msra.mxu0 0.0
      %895 = vmatpush.msra.mxu0 0.0
      %896 = vmatpush.msra.mxu0 0.0
      %897 = vmatpush.msra.mxu0 0.0
      %898 = vmatpush.msra.mxu0 0.0
      %899 = vmatpush.msra.mxu0 0.0
      %900 = vmatpush.msra.mxu0 0.0
      %901 = vmatpush.msra.mxu0 0.0
      %902 = vmatpush.msra.mxu0 0.0
      %903 = vmatpush.msra.mxu0 0.0
      %904 = vmatpush.msra.mxu0 %v887
      %905 = vmatmul.f32.gmra.mxu0 %v883
      %v906 = vpop.f32.mrf.mxu0
      %v907 = vadd.f32 %v878, %v906
      %908 = vdwg.mxu0
      %909 = vst [vmem:[%s238] sm:$0xff] %v907
      %v910 = vld [vmem:[%s2] sm:$0xff]
      %vm912 = vcmask 1040384
      %v913 = vrot.slane %v866, 7
      %v914 = vrot.slane %v868, 7
      %v915 = vsel %vm912, %v913, %v914
      %v917 = vsel %vm881, %v910, 0
      %v919 = vsel %vm885, %v915, 0
      %921 = vmatpush.msra.mxu0 0.0
      %922 = vmatpush.msra.mxu0 0.0
      %923 = vmatpush.msra.mxu0 0.0
      %924 = vmatpush.msra.mxu0 0.0
      %925 = vmatpush.msra.mxu0 0.0
      %926 = vmatpush.msra.mxu0 0.0
      %927 = vmatpush.msra.mxu0 0.0
      %928 = vmatpush.msra.mxu0 0.0
      %929 = vmatpush.msra.mxu0 0.0
      %930 = vmatpush.msra.mxu0 0.0
      %931 = vmatpush.msra.mxu0 0.0
      %932 = vmatpush.msra.mxu0 0.0
      %933 = vmatpush.msra.mxu0 0.0
      %934 = vmatpush.msra.mxu0 0.0
      %935 = vmatpush.msra.mxu0 0.0
      %936 = vmatpush.msra.mxu0 %v919
      %937 = vmatmul.f32.gmra.mxu0 %v917
      %v938 = vpop.f32.mrf.mxu0
      %v939 = vadd.f32 %v878, %v938
      %940 = vdwg.mxu0
      %941 = vst [vmem:[%s238 + $0x8] sm:$0xff] %v939
      %v942 = vld [vmem:[%s2] sm:$0xff]
      %vm944 = vcmask 1041408
      %v945 = vrot.slane %v868, 6
      %v946 = vrot.slane %v871, 6
      %v947 = vsel %vm944, %v945, %v946
      %v949 = vsel %vm881, %v942, 0
      %v951 = vsel %vm885, %v947, 0
      %953 = vmatpush.msra.mxu0 0.0
      %954 = vmatpush.msra.mxu0 0.0
      %955 = vmatpush.msra.mxu0 0.0
      %956 = vmatpush.msra.mxu0 0.0
      %957 = vmatpush.msra.mxu0 0.0
      %958 = vmatpush.msra.mxu0 0.0
      %959 = vmatpush.msra.mxu0 0.0
      %960 = vmatpush.msra.mxu0 0.0
      %961 = vmatpush.msra.mxu0 0.0
      %962 = vmatpush.msra.mxu0 0.0
      %963 = vmatpush.msra.mxu0 0.0
      %964 = vmatpush.msra.mxu0 0.0
      %965 = vmatpush.msra.mxu0 0.0
      %966 = vmatpush.msra.mxu0 0.0
      %967 = vmatpush.msra.mxu0 0.0
      %968 = vmatpush.msra.mxu0 %v951
      %969 = vmatmul.f32.gmra.mxu0 %v949
      %v970 = vpop.f32.mrf.mxu0
      %v971 = vadd.f32 %v878, %v970
      %972 = vdwg.mxu0
      %973 = vst [vmem:[%s238 + $0x10] sm:$0xff] %v971
      %s974 = smul.u32 3, %s20
      %p975 = scmp.lt.s32.totalorder %s19, 1
      %s976 = scalar_select %p975, %s19, 1
      %p977 = scmp.lt.s32.totalorder %s974, 5
      %s978 = scalar_select %p977, %s974, 5
      %s979 = smul.addr %s976, 6
      %s980 = sadd.s32 %s978, %s979
      %s981 = smul.addr %s980, 8
      %s982 = scalar_lea.vmem %s4, %s981
      // Predicated region
      $region37: #{_lambda_.1} parent=35 // pred_check
        %p983 = pneg %p141
      $region38: #{_lambda_.1} parent=35 // pred_check_branch
        %985 = sbr.rel (%p983) target = $region40
      $region39: #{_lambda_.1} parent=35 // pred_region
        %s986 = smul.u32 3, %s20
      $region40: #{_lambda_.1} parent=35 // pred_fallthru
        _
    $region36: #{_lambda_.1} parent=5 // pred_fallthru
      _
    %p987 = scmp.le.s32.totalorder 2, %s10
    // Predicated region
    $region41: #{_lambda_.1} parent=5 // pred_check
      %p988 = pneg %p987
    $region42: #{_lambda_.1} parent=5 // pred_check_branch
      %990 = sbr.rel (%p988) target = $region44
    $region43: #{_lambda_.1} parent=5 // pred_region
      %s991 = ssub.s32 %s10, 2
      // Predicated region
      $region45: #{_lambda_.1} parent=43 // pred_check
        %p992 = pneg %p147
      $region46: #{_lambda_.1} parent=43 // pred_check_branch
        %994 = sbr.rel (%p992) target = $region48
      $region47: #{_lambda_.1} parent=43 // pred_region
        %s995 = smul.u32 3, %s22
        %p996 = scmp.lt.s32.totalorder %s21, 1
        %s997 = scalar_select %p996, %s21, 1
        %p998 = scmp.lt.s32.totalorder %s995, 5
        %s999 = scalar_select %p998, %s995, 5
        %s1000 = smul.addr %s997, 6
        %s1001 = sadd.s32 %s999, %s1000
        %s1002 = smul.addr %s1001, 8
        %s1003 = scalar_lea.vmem %s4, %s1002
      $region48: #{_lambda_.1} parent=43 // pred_fallthru
        _
    $region44: #{_lambda_.1} parent=5 // pred_fallthru
      _
  $region6: #{_lambda_.1} parent=0 // loop_footer
    %s14 = sadd.s32 1, %s10
  $region7: #{_lambda_.1} parent=0 // loop_footer_branch
    %9 = sbr.rel target = $region3
  $region8: #{_lambda_.1} parent=0 // loop_exit
    _

</llo_original>
